<compile_context>
chip_gen: v7x
topology: tpu7x:2x2x1
jax: 0.10.0
libtpu: 0.0.40
codegen_flags: <defaults>
</compile_context>

<pallas_src>
import functools

import jax
import jax.numpy as jnp
from jax.experimental import pallas as pl
from jax.experimental.pallas import tpu as pltpu


# ----------------------------------------------------------------------------
# Fused Pallas kernel: one (image, row-tile) per grid step
# ----------------------------------------------------------------------------
def _residual_kernel(xp_ref, skip_ref, w_all_ref, w2_ref, o_ref, *, TH, W, WP, R):
    """xp_ref  : (1, (H+2)*WP, C) bf16  zero-padded image, flat, constant over tiles
       skip_ref: (1, TH*W, C)     f32   un-padded rows of this tile (skip path)
       w_all   : (C, 9*R)         bf16  3x3 weights stacked along the GEMM N dim
       w2      : (R, C)           bf16  1x1 weights
       o_ref   : (1, TH*W, C)     f32   output rows of this tile."""
    t = pl.program_id(1)

    # Padded-row window needed by this tile: TH output rows -> TH+2 padded rows.
    win_rows = (TH + 2) * WP
    base = pl.multiple_of(t * (TH * WP), TH * WP)          # sublane-aligned start
    xs = xp_ref[0, pl.ds(base, win_rows), :]               # (win_rows, C) bf16

    # ReLU (pads stay 0) -> single big MXU GEMM against the stacked weights.
    h = jnp.maximum(xs, 0)                                 # bf16, MXU operand
    p = jnp.dot(h, w_all_ref[...],
                preferred_element_type=jnp.float32)        # (win_rows, 9R) f32

    # Scatter the 9 taps.  WP is a multiple of 8, so this reshape is
    # tile-preserving (no relayout); the 9 slices are static and summed on VPU.
    p3 = p.reshape(TH + 2, WP, 9 * R)
    acc = jnp.zeros((TH, W, R), jnp.float32)
    for di in range(3):
        for dj in range(3):
            k = di * 3 + dj
            acc = acc + p3[di:di + TH, dj:dj + W, k * R:(k + 1) * R]

    # ReLU -> 1x1 conv (no bias).  (TH, W, R)->(TH*W, R) is tile-preserving.
    a2 = jnp.maximum(acc, 0.0).astype(jnp.bfloat16).reshape(TH * W, R)
    y = jnp.dot(a2, w2_ref[...], preferred_element_type=jnp.float32)   # (TH*W, C)

    # Skip connection (f32) and lane-dense, unmasked store.
    o_ref[0] = (skip_ref[0] + y).astype(o_ref.dtype)


# ----------------------------------------------------------------------------
# Wrapper: NCHW in / NCHW out (PyTorch convention)
# ----------------------------------------------------------------------------
def residual_forward(x_nchw, w3x3_hwio, w1x1_io, *, row_tile=8):
    N, C, H, W = x_nchw.shape
    R = w3x3_hwio.shape[-1]
    assert w3x3_hwio.shape == (3, 3, C, R)
    assert w1x1_io.shape == (R, C)

    TH = row_tile if H % row_tile == 0 else H               # output rows per tile
    n_tiles = H // TH
    HP = H + 2
    WP = ((W + 2 + 7) // 8) * 8                             # padded width, mult of 8

    # Interface-only layout change: NCHW -> NHWC (channel-minor = lane dim).
    x = jnp.transpose(x_nchw, (0, 2, 3, 1)).astype(jnp.float32)       # (N,H,W,C)
    x_flat = x.reshape(N, H * W, C)                                    # skip path

    # Conv-branch input: zero pad (1 top/bottom/left, rest right) + bf16 cast in
    # one fused XLA pass.  relu(bf16(x)) == bf16(relu(x)) -> numerics unchanged.
    xp = jnp.pad(x, ((0, 0), (1, 1), (1, WP - W - 1), (0, 0))).astype(jnp.bfloat16)
    xp_flat = xp.reshape(N, HP * WP, C)

    # Stack 3x3 weights along the GEMM N dim: W_all[c, (di*3+dj)*R + r].
    w_all = jnp.transpose(w3x3_hwio, (2, 0, 1, 3)).reshape(C, 9 * R).astype(jnp.bfloat16)
    w2 = w1x1_io.astype(jnp.bfloat16)

    kernel = functools.partial(_residual_kernel, TH=TH, W=W, WP=WP, R=R)
    out_flat = pl.pallas_call(
        kernel,
        out_shape=jax.ShapeDtypeStruct((N, H * W, C), jnp.float32),
        grid=(N, n_tiles),
        in_specs=[
            # Padded image: block index constant over the tile axis -> one DMA
            # per image; each tile slices its halo window out of VMEM.
            pl.BlockSpec((1, HP * WP, C), lambda n, t: (n, 0, 0)),
            pl.BlockSpec((1, TH * W, C), lambda n, t: (n, t, 0)),
            pl.BlockSpec((C, 9 * R), lambda n, t: (0, 0)),
            pl.BlockSpec((R, C), lambda n, t: (0, 0)),
        ],
        out_specs=pl.BlockSpec((1, TH * W, C), lambda n, t: (n, t, 0)),
        compiler_params=pltpu.CompilerParams(
            dimension_semantics=("parallel", "arbitrary")),
    )(xp_flat, x_flat, w_all, w2)

    out = out_flat.reshape(N, H, W, C)
    return jnp.transpose(out, (0, 3, 1, 2))                 # back to NCHW


# ----------------------------------------------------------------------------
# Pure-JAX reference (same bf16-operand / f32-accumulate numerics)
# ----------------------------------------------------------------------------
def residual_reference(x_nchw, w3x3_hwio, w1x1_io):
    x = jnp.transpose(x_nchw, (0, 2, 3, 1)).astype(jnp.float32)       # NHWC
    R, C = w1x1_io.shape

    h = jax.nn.relu(x).astype(jnp.bfloat16)
    h = jax.lax.conv_general_dilated(
        h, w3x3_hwio.astype(jnp.bfloat16), (1, 1), ((1, 1), (1, 1)),
        dimension_numbers=("NHWC", "HWIO", "NHWC"),
        preferred_element_type=jnp.float32)
    h = jax.nn.relu(h).astype(jnp.bfloat16)
    h = jax.lax.conv_general_dilated(
        h, w1x1_io.reshape(1, 1, R, C).astype(jnp.bfloat16),
        (1, 1), ((0, 0), (0, 0)),
        dimension_numbers=("NHWC", "HWIO", "NHWC"),
        preferred_element_type=jnp.float32)
    y = x + h
    return jnp.transpose(y, (0, 3, 1, 2))


if __name__ == "__main__":
    key = jax.random.PRNGKey(0)
    kx, k1, k2 = jax.random.split(key, 3)

    # in_channels == num_hiddens (required by the residual add); VQ-VAE defaults.
    N, C, H, W = 2, 128, 16, 16
    R = 32                                                   # num_residual_hiddens

    x = jax.random.normal(kx, (N, C, H, W), jnp.float32)     # NCHW, like PyTorch
    w3x3 = 0.05 * jax.random.normal(k1, (3, 3, C, R), jnp.float32)    # HWIO
    w1x1 = 0.05 * jax.random.normal(k2, (R, C), jnp.float32)

    out = jax.block_until_ready(residual_forward(x, w3x3, w1x1))
    assert out.shape == (N, C, H, W), out.shape

    ref = jax.block_until_ready(residual_reference(x, w3x3, w1x1))
    max_err = float(jnp.max(jnp.abs(out - ref)))
    assert max_err < 5e-3, f"max abs error {max_err}"

    print("KERNEL_OK")
</pallas_src>

<mosaic_0001>
module attributes {stable_mosaic.version = 11 : i64} {
  func.func @_residual_kernel(%arg0: i32, %arg1: i32, %arg2: memref<1x432x128xbf16, #tpu.memory_space<vmem>>, %arg3: memref<1x128x128xf32, #tpu.memory_space<vmem>>, %arg4: memref<128x288xbf16, #tpu.memory_space<vmem>>, %arg5: memref<32x128xbf16, #tpu.memory_space<vmem>>, %arg6: memref<1x128x128xf32, #tpu.memory_space<vmem>>) attributes {dimension_semantics = [#tpu.dimension_semantics<parallel>, #tpu.dimension_semantics<arbitrary>], iteration_bounds = array<i64: 2, 2>, scalar_prefetch = 0 : i64, scratch_operands = 0 : i64, tpu.core_type = #tpu.core_type<tc>, window_params = [{transform_indices = @transform_0, window_bounds = array<i64: 1, 432, 128>}, {transform_indices = @transform_1, window_bounds = array<i64: 1, 128, 128>}, {pipeline_mode = #tpu.pipeline_mode<synchronous>, transform_indices = @transform_2, window_bounds = array<i64: 128, 288>}, {pipeline_mode = #tpu.pipeline_mode<synchronous>, transform_indices = @transform_3, window_bounds = array<i64: 32, 128>}, {transform_indices = @transform_4, window_bounds = array<i64: 1, 128, 128>}]} {
    %c192_i32 = arith.constant 192 : i32
    %0 = arith.muli %arg1, %c192_i32 : i32
    %1 = tpu.assume_multiple %0, 192 : i32
    %c0 = arith.constant 0 : index
    %2 = arith.index_cast %1 : i32 to index
    %c0_0 = arith.constant 0 : index
    %3 = vector.load %arg2[%c0, %2, %c0_0] : memref<1x432x128xbf16, #tpu.memory_space<vmem>>, vector<1x240x128xbf16>
    %4 = vector.shape_cast %3 : vector<1x240x128xbf16> to vector<240x128xbf16>
    %cst = arith.constant 0.000000e+00 : bf16
    %5 = vector.broadcast %cst : bf16 to vector<240x128xbf16>
    %6 = arith.maximumf %4, %5 : vector<240x128xbf16>
    %c0_1 = arith.constant 0 : index
    %c0_2 = arith.constant 0 : index
    %7 = vector.load %arg4[%c0_1, %c0_2] : memref<128x288xbf16, #tpu.memory_space<vmem>>, vector<128x288xbf16>
    %cst_3 = arith.constant dense<0.000000e+00> : vector<240x288xf32>
    %8 = tpu.matmul %6, %7, %cst_3 {dimension_numbers = #tpu.dot_dimension_numbers<[1], [0], [0], [1], [0, 0, 1, 1], [], []>} : vector<240x128xbf16>, vector<128x288xbf16>, vector<240x288xf32> -> vector<240x288xf32>
    %9 = vector.shape_cast %8 : vector<240x288xf32> to vector<10x24x288xf32>
    %cst_4 = arith.constant 0.000000e+00 : f32
    %10 = vector.broadcast %cst_4 : f32 to vector<8x16x32xf32>
    %11 = vector.extract_strided_slice %9 {offsets = [0, 0, 0], sizes = [8, 16, 32], strides = [1, 1, 1]} : vector<10x24x288xf32> to vector<8x16x32xf32>
    %12 = arith.addf %10, %11 : vector<8x16x32xf32>
    %13 = vector.extract_strided_slice %9 {offsets = [0, 1, 32], sizes = [8, 16, 32], strides = [1, 1, 1]} : vector<10x24x288xf32> to vector<8x16x32xf32>
    %14 = arith.addf %12, %13 : vector<8x16x32xf32>
    %15 = vector.extract_strided_slice %9 {offsets = [0, 2, 64], sizes = [8, 16, 32], strides = [1, 1, 1]} : vector<10x24x288xf32> to vector<8x16x32xf32>
    %16 = arith.addf %14, %15 : vector<8x16x32xf32>
    %17 = vector.extract_strided_slice %9 {offsets = [1, 0, 96], sizes = [8, 16, 32], strides = [1, 1, 1]} : vector<10x24x288xf32> to vector<8x16x32xf32>
    %18 = arith.addf %16, %17 : vector<8x16x32xf32>
    %19 = vector.extract_strided_slice %9 {offsets = [1, 1, 128], sizes = [8, 16, 32], strides = [1, 1, 1]} : vector<10x24x288xf32> to vector<8x16x32xf32>
    %20 = arith.addf %18, %19 : vector<8x16x32xf32>
    %21 = vector.extract_strided_slice %9 {offsets = [1, 2, 160], sizes = [8, 16, 32], strides = [1, 1, 1]} : vector<10x24x288xf32> to vector<8x16x32xf32>
    %22 = arith.addf %20, %21 : vector<8x16x32xf32>
    %23 = vector.extract_strided_slice %9 {offsets = [2, 0, 192], sizes = [8, 16, 32], strides = [1, 1, 1]} : vector<10x24x288xf32> to vector<8x16x32xf32>
    %24 = arith.addf %22, %23 : vector<8x16x32xf32>
    %25 = vector.extract_strided_slice %9 {offsets = [2, 1, 224], sizes = [8, 16, 32], strides = [1, 1, 1]} : vector<10x24x288xf32> to vector<8x16x32xf32>
    %26 = arith.addf %24, %25 : vector<8x16x32xf32>
    %27 = vector.extract_strided_slice %9 {offsets = [2, 2, 256], sizes = [8, 16, 32], strides = [1, 1, 1]} : vector<10x24x288xf32> to vector<8x16x32xf32>
    %28 = arith.addf %26, %27 : vector<8x16x32xf32>
    %cst_5 = arith.constant 0.000000e+00 : f32
    %29 = vector.broadcast %cst_5 : f32 to vector<8x16x32xf32>
    %30 = arith.maximumf %28, %29 : vector<8x16x32xf32>
    %31 = arith.truncf %30 : vector<8x16x32xf32> to vector<8x16x32xbf16>
    %32 = vector.shape_cast %31 : vector<8x16x32xbf16> to vector<128x32xbf16>
    %c0_6 = arith.constant 0 : index
    %c0_7 = arith.constant 0 : index
    %33 = vector.load %arg5[%c0_6, %c0_7] : memref<32x128xbf16, #tpu.memory_space<vmem>>, vector<32x128xbf16>
    %cst_8 = arith.constant dense<0.000000e+00> : vector<128x128xf32>
    %34 = tpu.matmul %32, %33, %cst_8 {dimension_numbers = #tpu.dot_dimension_numbers<[1], [0], [0], [1], [0, 0, 1, 1], [], []>} : vector<128x32xbf16>, vector<32x128xbf16>, vector<128x128xf32> -> vector<128x128xf32>
    %c0_9 = arith.constant 0 : index
    %c0_10 = arith.constant 0 : index
    %c0_11 = arith.constant 0 : index
    %35 = vector.load %arg3[%c0_9, %c0_10, %c0_11] : memref<1x128x128xf32, #tpu.memory_space<vmem>>, vector<1x128x128xf32>
    %36 = vector.shape_cast %35 : vector<1x128x128xf32> to vector<128x128xf32>
    %37 = arith.addf %36, %34 : vector<128x128xf32>
    %c0_12 = arith.constant 0 : index
    %c0_13 = arith.constant 0 : index
    %c0_14 = arith.constant 0 : index
    %38 = vector.load %arg6[%c0_12, %c0_13, %c0_14] : memref<1x128x128xf32, #tpu.memory_space<vmem>>, vector<1x128x128xf32>
    %39 = vector.shape_cast %38 : vector<1x128x128xf32> to vector<128x128xf32>
    %40 = vector.shape_cast %37 : vector<128x128xf32> to vector<1x128x128xf32>
    tpu.vector_store %arg6[%c0_12, %c0_13, %c0_14], %40 {strides = array<i32>} : memref<1x128x128xf32, #tpu.memory_space<vmem>>, vector<1x128x128xf32>,
    return
  }
  func.func @transform_0(%arg0: i32, %arg1: i32) -> (i32, i32, i32) {
    %c0_i32 = arith.constant 0 : i32
    %c0_i32_0 = arith.constant 0 : i32
    %c0_i32_1 = arith.constant 0 : i32
    return %arg0, %c0_i32, %c0_i32_0 : i32, i32, i32
  }
  func.func @transform_1(%arg0: i32, %arg1: i32) -> (i32, i32, i32) {
    %c0_i32 = arith.constant 0 : i32
    %c0_i32_0 = arith.constant 0 : i32
    return %arg0, %arg1, %c0_i32 : i32, i32, i32
  }
  func.func @transform_2(%arg0: i32, %arg1: i32) -> (i32, i32) {
    %c0_i32 = arith.constant 0 : i32
    %c0_i32_0 = arith.constant 0 : i32
    %c0_i32_1 = arith.constant 0 : i32
    return %c0_i32, %c0_i32_0 : i32, i32
  }
  func.func @transform_3(%arg0: i32, %arg1: i32) -> (i32, i32) {
    %c0_i32 = arith.constant 0 : i32
    %c0_i32_0 = arith.constant 0 : i32
    %c0_i32_1 = arith.constant 0 : i32
    return %c0_i32, %c0_i32_0 : i32, i32
  }
  func.func @transform_4(%arg0: i32, %arg1: i32) -> (i32, i32, i32) {
    %c0_i32 = arith.constant 0 : i32
    %c0_i32_0 = arith.constant 0 : i32
    return %arg0, %arg1, %c0_i32 : i32, i32, i32
  }
}

</mosaic_0001>

<llo_original>
// kernel: tpu_custom_call.1
$region0: #{tpu_custom_call.1}
  #allocation0 [shape = 'u32[]', space=smem, size = 0x4, offset = 0x4, fixed_abs, tag = 'smem constant byte address 0x4 - core index']
  #allocation1 [shape = 'u32[144,128]{1,0:T(1,128)}', space=vmem, size = 0x12000, scoped, tag = 'internal scratch']
  %s0 = inlined_call_operand.hbm [shape: bf16[2,432,128], index: 0, kind: input, shape index: {}]
  %s1 = inlined_call_operand.hbm [shape: f32[2,256,128], index: 1, kind: input, shape index: {}]
  %s2 = inlined_call_operand.vmem [shape: bf16[128,288], index: 2, kind: input, shape index: {}]
  %s3 = inlined_call_operand.vmem [shape: bf16[32,128], index: 3, kind: input, shape index: {}]
  %s4 = inlined_call_operand.hbm [shape: f32[2,256,128], index: 4, kind: output, shape index: {}]
  %s5 = sld [smem:[#allocation0]]
  $region57: #{tpu_custom_call.1} parent=0
    _
  %s7 = ssub.s32 1, %s5
  %s8 = scalar_select 0, %s7, %s5
  $region1: #{tpu_custom_call.1} parent=0
    #allocation2 [shape = 'u8[221184]{0}', space=vmem, size = 0x36000, scoped, tag = 'input window, operand 0']
    #allocation3 [shape = 's32[2]{0}', space=sflag, size = 0x8, scoped, tag = 'scoped memory for tpu_custom_call.1']
    #allocation4 [shape = 's32[2]{0}', space=sflag, size = 0x8, scoped, tag = 'scoped memory for tpu_custom_call.1']
    #allocation5 [shape = 'u8[131072]{0}', space=vmem, size = 0x20000, scoped, tag = 'input window, operand 1']
    #allocation6 [shape = 's32[2]{0}', space=sflag, size = 0x8, scoped, tag = 'scoped memory for tpu_custom_call.1']
    #allocation7 [shape = 'u8[131072]{0}', space=vmem, size = 0x20000, scoped, tag = 'output window, operand 0']
    %9 = vsyncpa [#allocation3], 0
    %s10 = scalar_lea.sflag [#allocation3], 1
    %11 = vsyncpa %s10, 0
    %12 = vsyncpa [#allocation6], 0
    %s13 = scalar_lea.sflag [#allocation6], 1
    %14 = vsyncpa %s13, 0
    %15 = vsyncpa [#allocation4], 0
    %s16 = scalar_lea.sflag [#allocation4], 1
    %17 = vsyncpa %s16, 0
    loop: start=0, step=1, limit=6
    $region2: #{tpu_custom_call.1} parent=1 // loop_pre_header
      _
    $region3: #{tpu_custom_call.1} parent=1 // loop_header
      %s19 = sphi 0, %s23
      %p20 = scmp.ge.s32.totalorder %s19, 6
      %s26 = sphi 0, %s38
      %s27 = sphi 0, %s34
      %s28 = sphi 0, %s26
      %s29 = sphi 0, %s27
      %s30 = sphi 0, %s28
      %s31 = sphi 0, %s29
      %s41 = sphi 0, %s43
      %s44 = sphi 0, %s41
      %s45 = sphi 0, %s44
      %s61 = sphi 0, %s45
      %s69 = sphi 0, %s71
      %s72 = sphi 0, %s69
      %s73 = sphi 0, %s72
      %s89 = sphi 0, %s73
      %s93 = sphi 0, %s93
      %s95 = sphi 0, %s93
      %s96 = sphi 0, %s95
      %s110 = sphi 0, %s96
      %s114 = sphi 0, %s114
      %s116 = sphi 0, %s114
      %s117 = sphi 0, %s116
      %s131 = sphi 0, %s117
      %s139 = sphi 0, %s141
      %s142 = sphi 0, %s139
      %s143 = sphi 0, %s142
      %s159 = sphi 0, %s143
    $region4: #{tpu_custom_call.1} parent=1 // loop_header_branch
      %22 = sbr.rel (%p20) target = $region8
    $region5: #{tpu_custom_call.1} parent=1 // loop_body
      %s24 = ssub.s32 %s19, 1
      %s25 = ssub.s32 %s19, 2
      %s32 = sadd.s32 1, %s27
      %p33 = scmp.ge.s32.totalorder %s32, 2
      %s34 = scalar_select %p33, 0, %s32
      %s35 = sadd.s32 1, %s26
      %s36 = scalar_select %p33, %s35, %s26
      %p37 = scmp.ge.s32.totalorder %s36, 2
      %s38 = scalar_select %p37, 0, %s36
      %s39 = ssub.s32 %s26, %s38
      %p40 = scmp.eq.s32.totalorder %s39, 0
      %s42 = sadd.s32 %s41, 1
      %s43 = scalar_select %p40, %s41, %s42
      %p46 = pneg %p40
      %p47 = scmp.eq.s32.totalorder %s19, 3
      %p48 = por %p46, %p47
      %p49 = scmp.ne.s32.totalorder %s41, %s44
      %p50 = scmp.eq.s32.totalorder %s19, 0
      %p51 = por %p49, %p50
      %p52 = scmp.ne.s32.totalorder %s41, %s44
      %p53 = scmp.eq.s32.totalorder %s24, 3
      %p54 = por %p52, %p53
      %p55 = scmp.ne.s32.totalorder %s44, %s45
      %p56 = scmp.eq.s32.totalorder %s24, 0
      %p57 = por %p55, %p56
      %p58 = scmp.ne.s32.totalorder %s44, %s45
      %p59 = scmp.eq.s32.totalorder %s25, 3
      %p60 = por %p58, %p59
      %p62 = scmp.ne.s32.totalorder %s45, %s61
      %p63 = scmp.eq.s32.totalorder %s25, 0
      %p64 = por %p62, %p63
      %s65 = ssub.s32 %s26, %s38
      %s66 = ssub.s32 %s27, %s34
      %s67 = sor.u32 %s65, %s66
      %p68 = scmp.eq.s32.totalorder %s67, 0
      %s70 = sadd.s32 %s69, 1
      %s71 = scalar_select %p68, %s69, %s70
      %p74 = pneg %p68
      %p75 = scmp.eq.s32.totalorder %s19, 3
      %p76 = por %p74, %p75
      %p77 = scmp.ne.s32.totalorder %s69, %s72
      %p78 = scmp.eq.s32.totalorder %s19, 0
      %p79 = por %p77, %p78
      %p80 = scmp.ne.s32.totalorder %s69, %s72
      %p81 = scmp.eq.s32.totalorder %s24, 3
      %p82 = por %p80, %p81
      %p83 = scmp.ne.s32.totalorder %s72, %s73
      %p84 = scmp.eq.s32.totalorder %s24, 0
      %p85 = por %p83, %p84
      %p86 = scmp.ne.s32.totalorder %s72, %s73
      %p87 = scmp.eq.s32.totalorder %s25, 3
      %p88 = por %p86, %p87
      %p90 = scmp.ne.s32.totalorder %s73, %s89
      %p91 = scmp.eq.s32.totalorder %s25, 0
      %p92 = por %p90, %p91
      %s94 = sadd.s32 %s93, 1
      %p97 = scmp.eq.s32.totalorder %s19, 3
      %p98 = scmp.ne.s32.totalorder %s93, %s95
      %p99 = scmp.eq.s32.totalorder %s19, 0
      %p100 = por %p98, %p99
      %p101 = scmp.ne.s32.totalorder %s93, %s95
      %p102 = scmp.eq.s32.totalorder %s24, 3
      %p103 = por %p101, %p102
      %p104 = scmp.ne.s32.totalorder %s95, %s96
      %p105 = scmp.eq.s32.totalorder %s24, 0
      %p106 = por %p104, %p105
      %p107 = scmp.ne.s32.totalorder %s95, %s96
      %p108 = scmp.eq.s32.totalorder %s25, 3
      %p109 = por %p107, %p108
      %p111 = scmp.ne.s32.totalorder %s96, %s110
      %p112 = scmp.eq.s32.totalorder %s25, 0
      %p113 = por %p111, %p112
      %s115 = sadd.s32 %s114, 1
      %p118 = scmp.eq.s32.totalorder %s19, 3
      %p119 = scmp.ne.s32.totalorder %s114, %s116
      %p120 = scmp.eq.s32.totalorder %s19, 0
      %p121 = por %p119, %p120
      %p122 = scmp.ne.s32.totalorder %s114, %s116
      %p123 = scmp.eq.s32.totalorder %s24, 3
      %p124 = por %p122, %p123
      %p125 = scmp.ne.s32.totalorder %s116, %s117
      %p126 = scmp.eq.s32.totalorder %s24, 0
      %p127 = por %p125, %p126
      %p128 = scmp.ne.s32.totalorder %s116, %s117
      %p129 = scmp.eq.s32.totalorder %s25, 3
      %p130 = por %p128, %p129
      %p132 = scmp.ne.s32.totalorder %s117, %s131
      %p133 = scmp.eq.s32.totalorder %s25, 0
      %p134 = por %p132, %p133
      %s135 = ssub.s32 %s26, %s38
      %s136 = ssub.s32 %s27, %s34
      %s137 = sor.u32 %s135, %s136
      %p138 = scmp.eq.s32.totalorder %s137, 0
      %s140 = sadd.s32 %s139, 1
      %s141 = scalar_select %p138, %s139, %s140
      %p144 = pneg %p138
      %p145 = scmp.eq.s32.totalorder %s19, 3
      %p146 = por %p144, %p145
      %p147 = scmp.ne.s32.totalorder %s139, %s142
      %p148 = scmp.eq.s32.totalorder %s19, 0
      %p149 = por %p147, %p148
      %p150 = scmp.ne.s32.totalorder %s139, %s142
      %p151 = scmp.eq.s32.totalorder %s24, 3
      %p152 = por %p150, %p151
      %p153 = scmp.ne.s32.totalorder %s142, %s143
      %p154 = scmp.eq.s32.totalorder %s24, 0
      %p155 = por %p153, %p154
      %p156 = scmp.ne.s32.totalorder %s142, %s143
      %p157 = scmp.eq.s32.totalorder %s25, 3
      %p158 = por %p156, %p157
      %p160 = scmp.ne.s32.totalorder %s143, %s159
      %p161 = scmp.eq.s32.totalorder %s25, 0
      %p162 = por %p160, %p161
      %p163 = scmp.le.s32.totalorder 1, %s19
      %p164 = scmp.lt.s32.totalorder %s19, 5
      %p165 = pnand %p163, %p164
      %p166 = pneg %p165
      // Predicated region
      $region9: #{tpu_custom_call.1} parent=5 // pred_check
        _
      $region10: #{tpu_custom_call.1} parent=5 // pred_check_branch
        %168 = sbr.rel (%p165) target = $region12
      $region11: #{tpu_custom_call.1} parent=5 // pred_region
        %s169 = ssub.s32 %s19, 1
        // Predicated region
        $region13: #{tpu_custom_call.1} parent=11 // pred_check
          %p170 = pneg %p106
        $region14: #{tpu_custom_call.1} parent=11 // pred_check_branch
          %172 = sbr.rel (%p170) target = $region16
        $region15: #{tpu_custom_call.1} parent=11 // pred_region
          _
        $region16: #{tpu_custom_call.1} parent=11 // pred_fallthru
          _
        // Predicated region
        $region17: #{tpu_custom_call.1} parent=11 // pred_check
          %p173 = pneg %p127
        $region18: #{tpu_custom_call.1} parent=11 // pred_check_branch
          %175 = sbr.rel (%p173) target = $region20
        $region19: #{tpu_custom_call.1} parent=11 // pred_region
          _
        $region20: #{tpu_custom_call.1} parent=11 // pred_fallthru
          _
      $region12: #{tpu_custom_call.1} parent=5 // pred_fallthru
        _
      %p176 = scmp.lt.s32.totalorder %s19, 4
      // Predicated region
      $region21: #{tpu_custom_call.1} parent=5 // pred_check
        %p177 = pneg %p176
      $region22: #{tpu_custom_call.1} parent=5 // pred_check_branch
        %179 = sbr.rel (%p177) target = $region24
      $region23: #{tpu_custom_call.1} parent=5 // pred_region
        // Predicated region
        $region25: #{tpu_custom_call.1} parent=23 // pred_check
          %p180 = pneg %p51
        $region26: #{tpu_custom_call.1} parent=23 // pred_check_branch
          %182 = sbr.rel (%p180) target = $region28
        $region27: #{tpu_custom_call.1} parent=23 // pred_region
          %s183 = sand.u32 %s41, 1
          %s184 = scalar_lea.sflag [#allocation3], %s183
          %s185 = sand.u32 %s41, 1
          %s186 = smul.addr %s185, 216
          %s187 = scalar_lea.vmem [#allocation2], %s186
          %s189 = ssub.s32 3456, 3456
          %190 = vsyncadd %s184, %s189
          %s191 = smul.addr %s26, 54
          %s192 = smul.addr %s191, 64
          %s193 = scalar_lea.hbm %s0, %s192
          %s194 = sshll.u32 %s187, 4
          %s195 = int_to_ptr.vmem [resolvable:$true] %s194
          %200 = dma.hbm_to_vmem [thread:$0]  %s193, 3456, %s195, %s184, 64, 64, 4
        $region28: #{tpu_custom_call.1} parent=23 // pred_fallthru
          _
        // Predicated region
        $region29: #{tpu_custom_call.1} parent=23 // pred_check
          %p201 = pneg %p79
        $region30: #{tpu_custom_call.1} parent=23 // pred_check_branch
          %203 = sbr.rel (%p201) target = $region32
        $region31: #{tpu_custom_call.1} parent=23 // pred_region
          %s204 = sand.u32 %s69, 1
          %s205 = scalar_lea.sflag [#allocation6], %s204
          %s206 = sand.u32 %s69, 1
          %s207 = smul.addr %s206, 128
          %s208 = scalar_lea.vmem [#allocation5], %s207
          %s209 = smul.u32 16, %s27
          %s211 = ssub.s32 2048, 2048
          %212 = vsyncadd %s205, %s211
          %s213 = smul.addr %s26, 32
          %s214 = sadd.s32 %s209, %s213
          %s215 = smul.addr %s214, 128
          %s216 = scalar_lea.hbm %s1, %s215
          %s217 = sshll.u32 %s208, 4
          %s218 = int_to_ptr.vmem [resolvable:$true] %s217
          %223 = dma.hbm_to_vmem [thread:$0]  %s216, 2048, %s218, %s205, 128, 128, 8
        $region32: #{tpu_custom_call.1} parent=23 // pred_fallthru
          _
      $region24: #{tpu_custom_call.1} parent=5 // pred_fallthru
        _
      %p224 = scmp.le.s32.totalorder 1, %s19
      %p225 = scmp.lt.s32.totalorder %s19, 5
      %p226 = pnand %p224, %p225
      %p227 = pneg %p226
      // Predicated region
      $region33: #{tpu_custom_call.1} parent=5 // pred_check
        _
      $region34: #{tpu_custom_call.1} parent=5 // pred_check_branch
        %229 = sbr.rel (%p226) target = $region36
      $region35: #{tpu_custom_call.1} parent=5 // pred_region
        %s230 = ssub.s32 %s19, 1
        %s231 = sand.u32 %s44, 1
        %s232 = scalar_lea.sflag [#allocation3], %s231
        %s233 = sand.u32 %s44, 1
        %s234 = smul.addr %s233, 216
        %s235 = scalar_lea.vmem [#allocation2], %s234
        // Predicated region
        $region37: #{tpu_custom_call.1} parent=35 // pred_check
          %p236 = pneg %p57
        $region38: #{tpu_custom_call.1} parent=35 // pred_check_branch
          %238 = sbr.rel (%p236) target = $region40
        $region39: #{tpu_custom_call.1} parent=35 // pred_region
          %239 = dma.done %s232, 3456
        $region40: #{tpu_custom_call.1} parent=35 // pred_fallthru
          _
        %s240 = sand.u32 %s72, 1
        %s241 = scalar_lea.sflag [#allocation6], %s240
        %s242 = sand.u32 %s72, 1
        %s243 = smul.addr %s242, 128
        %s244 = scalar_lea.vmem [#allocation5], %s243
        // Predicated region
        $region41: #{tpu_custom_call.1} parent=35 // pred_check
          %p245 = pneg %p85
        $region42: #{tpu_custom_call.1} parent=35 // pred_check_branch
          %247 = sbr.rel (%p245) target = $region44
        $region43: #{tpu_custom_call.1} parent=35 // pred_region
          %248 = dma.done %s241, 2048
        $region44: #{tpu_custom_call.1} parent=35 // pred_fallthru
          _
        %s249 = sand.u32 %s44, 1
        %s250 = scalar_lea.sflag [#allocation3], %s249
        %s251 = sand.u32 %s44, 1
        %s252 = smul.addr %s251, 216
        %s253 = scalar_lea.vmem [#allocation2], %s252
        %p254 = pneg %p57
        %p255 = pneg %p54
        %s256 = sand.u32 %s72, 1
        %s257 = scalar_lea.sflag [#allocation6], %s256
        %s258 = sand.u32 %s72, 1
        %s259 = smul.addr %s258, 128
        %s260 = scalar_lea.vmem [#allocation5], %s259
        %p261 = pneg %p85
        %p262 = pneg %p82
        %p263 = pneg %p106
        %p264 = pneg %p103
        %p265 = pneg %p127
        %p266 = pneg %p124
        %p267 = pneg %p155
        %p268 = pneg %p152
        %s269 = sand.u32 %s142, 1
        %s270 = scalar_lea.sflag [#allocation4], %s269
        %s271 = sand.u32 %s142, 1
        %s272 = smul.addr %s271, 128
        %s273 = scalar_lea.vmem [#allocation7], %s272
        %s274 = smul.u32 16, %s29
        %s275 = smul.u32 16, %s29
        %s277 = smul.u32 %s29, 192
        %s278 = sshra.s32 %s277, 3
        %s279 = sand.u32 %s277, 7
        %s280 = smul.addr %s278, 4
        %s281 = scalar_lea.vmem %s235, %s280 [#allocation2]
        %v282 = vld [vmem:[%s281] sm:$0xf]
        %v283 = vld [vmem:[%s281 + $0x4] sm:$0xf]
        %v284 = vld [vmem:[%s281 + $0x8] sm:$0xf]
        %v285 = vld [vmem:[%s281 + $0xc] sm:$0xf]
        %v286 = vld [vmem:[%s281 + $0x10] sm:$0xf]
        %v287 = vld [vmem:[%s281 + $0x14] sm:$0xf]
        %v288 = vld [vmem:[%s281 + $0x18] sm:$0xf]
        %v289 = vld [vmem:[%s281 + $0x1c] sm:$0xf]
        %v290 = vld [vmem:[%s281 + $0x20] sm:$0xf]
        %v291 = vld [vmem:[%s281 + $0x24] sm:$0xf]
        %v292 = vld [vmem:[%s281 + $0x28] sm:$0xf]
        %v293 = vld [vmem:[%s281 + $0x2c] sm:$0xf]
        %v294 = vld [vmem:[%s281 + $0x30] sm:$0xf]
        %v295 = vld [vmem:[%s281 + $0x34] sm:$0xf]
        %v296 = vld [vmem:[%s281 + $0x38] sm:$0xf]
        %v297 = vld [vmem:[%s281 + $0x3c] sm:$0xf]
        %v298 = vld [vmem:[%s281 + $0x40] sm:$0xf]
        %v299 = vld [vmem:[%s281 + $0x44] sm:$0xf]
        %v300 = vld [vmem:[%s281 + $0x48] sm:$0xf]
        %v301 = vld [vmem:[%s281 + $0x4c] sm:$0xf]
        %v302 = vld [vmem:[%s281 + $0x50] sm:$0xf]
        %v303 = vld [vmem:[%s281 + $0x54] sm:$0xf]
        %v304 = vld [vmem:[%s281 + $0x58] sm:$0xf]
        %v305 = vld [vmem:[%s281 + $0x5c] sm:$0xf]
        %v306 = vld [vmem:[%s281 + $0x60] sm:$0xf]
        %v307 = vld [vmem:[%s281 + $0x64] sm:$0xf]
        %v308 = vld [vmem:[%s281 + $0x68] sm:$0xf]
        %v309 = vld [vmem:[%s281 + $0x6c] sm:$0xf]
        %v310 = vld [vmem:[%s281 + $0x70] sm:$0xf]
        %v311 = vld [vmem:[%s281 + $0x74] sm:$0xf]
        %v312 = vmax.bf16 %v282, 0
        %v313 = vmax.bf16 %v283, 0
        %v314 = vmax.bf16 %v284, 0
        %v315 = vmax.bf16 %v285, 0
        %v316 = vmax.bf16 %v286, 0
        %v317 = vmax.bf16 %v287, 0
        %v318 = vmax.bf16 %v288, 0
        %v319 = vmax.bf16 %v289, 0
        %v320 = vmax.bf16 %v290, 0
        %v321 = vmax.bf16 %v291, 0
        %v322 = vmax.bf16 %v292, 0
        %v323 = vmax.bf16 %v293, 0
        %v324 = vmax.bf16 %v294, 0
        %v325 = vmax.bf16 %v295, 0
        %v326 = vmax.bf16 %v296, 0
        %v327 = vmax.bf16 %v297, 0
        %v328 = vmax.bf16 %v298, 0
        %v329 = vmax.bf16 %v299, 0
        %v330 = vmax.bf16 %v300, 0
        %v331 = vmax.bf16 %v301, 0
        %v332 = vmax.bf16 %v302, 0
        %v333 = vmax.bf16 %v303, 0
        %v334 = vmax.bf16 %v304, 0
        %v335 = vmax.bf16 %v305, 0
        %v336 = vmax.bf16 %v306, 0
        %v337 = vmax.bf16 %v307, 0
        %v338 = vmax.bf16 %v308, 0
        %v339 = vmax.bf16 %v309, 0
        %v340 = vmax.bf16 %v310, 0
        %v341 = vmax.bf16 %v311, 0
        %v342 = vld [vmem:[%s2] sm:$0xff]
        %v343 = vld [vmem:[%s2 + $0x8] sm:$0xf]
        %v344 = vld [vmem:[%s2 + $0xc] sm:$0xff]
        %v345 = vld [vmem:[%s2 + $0x14] sm:$0xf]
        %v346 = vld [vmem:[%s2 + $0x18] sm:$0xff]
        %v347 = vld [vmem:[%s2 + $0x20] sm:$0xf]
        %v348 = vld [vmem:[%s2 + $0x24] sm:$0xff]
        %v349 = vld [vmem:[%s2 + $0x2c] sm:$0xf]
        %v350 = vld [vmem:[%s2 + $0x30] sm:$0xff]
        %v351 = vld [vmem:[%s2 + $0x38] sm:$0xf]
        %v352 = vld [vmem:[%s2 + $0x3c] sm:$0xff]
        %v353 = vld [vmem:[%s2 + $0x44] sm:$0xf]
        %v354 = vld [vmem:[%s2 + $0x48] sm:$0xff]
        %v355 = vld [vmem:[%s2 + $0x50] sm:$0xf]
        %v356 = vld [vmem:[%s2 + $0x54] sm:$0xff]
        %v357 = vld [vmem:[%s2 + $0x5c] sm:$0xf]
        %v358 = vld [vmem:[%s2 + $0x60] sm:$0xff]
        %v359 = vld [vmem:[%s2 + $0x68] sm:$0xf]
        %v360 = vld [vmem:[%s2 + $0x6c] sm:$0xff]
        %v361 = vld [vmem:[%s2 + $0x74] sm:$0xf]
        %v362 = vld [vmem:[%s2 + $0x78] sm:$0xff]
        %v363 = vld [vmem:[%s2 + $0x80] sm:$0xf]
        %v364 = vld [vmem:[%s2 + $0x84] sm:$0xff]
        %v365 = vld [vmem:[%s2 + $0x8c] sm:$0xf]
        %v366 = vld [vmem:[%s2 + $0x90] sm:$0xff]
        %v367 = vld [vmem:[%s2 + $0x98] sm:$0xf]
        %v368 = vld [vmem:[%s2 + $0x9c] sm:$0xff]
        %v369 = vld [vmem:[%s2 + $0xa4] sm:$0xf]
        %v370 = vld [vmem:[%s2 + $0xa8] sm:$0xff]
        %v371 = vld [vmem:[%s2 + $0xb0] sm:$0xf]
        %v372 = vld [vmem:[%s2 + $0xb4] sm:$0xff]
        %v373 = vld [vmem:[%s2 + $0xbc] sm:$0xf]
        %v404 = vunpack.c.l.b16 %v312
        %v405 = vunpack.c.l.b16 %v313
        %v406 = vunpack.c.l.b16 %v314
        %v407 = vunpack.c.l.b16 %v315
        %v408 = vunpack.c.l.b16 %v316
        %v409 = vunpack.c.l.b16 %v317
        %v410 = vunpack.c.l.b16 %v318
        %v411 = vunpack.c.l.b16 %v319
        %v412 = vunpack.c.l.b16 %v320
        %v413 = vunpack.c.l.b16 %v321
        %v414 = vunpack.c.l.b16 %v322
        %v415 = vunpack.c.l.b16 %v323
        %v416 = vunpack.c.l.b16 %v324
        %v417 = vunpack.c.l.b16 %v325
        %v418 = vunpack.c.l.b16 %v326
        %v419 = vunpack.c.l.b16 %v327
        %v420 = vunpack.c.l.b16 %v328
        %v421 = vunpack.c.l.b16 %v329
        %v422 = vunpack.c.l.b16 %v330
        %v423 = vunpack.c.l.b16 %v331
        %v424 = vunpack.c.l.b16 %v332
        %v425 = vunpack.c.l.b16 %v333
        %v426 = vunpack.c.l.b16 %v334
        %v427 = vunpack.c.l.b16 %v335
        %v428 = vunpack.c.l.b16 %v336
        %v429 = vunpack.c.l.b16 %v337
        %v430 = vunpack.c.l.b16 %v338
        %v431 = vunpack.c.l.b16 %v339
        %v432 = vunpack.c.l.b16 %v340
        %v433 = vunpack.c.l.b16 %v341
        %v434 = vpack.c.b16 %v405, %v404
        %v435 = vpack.c.b16 %v407, %v406
        %v436 = vpack.c.b16 %v409, %v408
        %v437 = vpack.c.b16 %v411, %v410
        %v438 = vpack.c.b16 %v413, %v412
        %v439 = vpack.c.b16 %v415, %v414
        %v440 = vpack.c.b16 %v417, %v416
        %v441 = vpack.c.b16 %v419, %v418
        %v442 = vpack.c.b16 %v421, %v420
        %v443 = vpack.c.b16 %v423, %v422
        %v444 = vpack.c.b16 %v425, %v424
        %v445 = vpack.c.b16 %v427, %v426
        %v446 = vpack.c.b16 %v429, %v428
        %v447 = vpack.c.b16 %v431, %v430
        %v448 = vpack.c.b16 %v433, %v432
        %v496 = vunpack.c.l.b16 %v342
        %v497 = vunpack.c.h.b16 %v342
        %v498 = vunpack.c.l.b16 %v343
        %v499 = vunpack.c.l.b16 %v344
        %v500 = vunpack.c.h.b16 %v344
        %v501 = vunpack.c.l.b16 %v345
        %v502 = vunpack.c.l.b16 %v346
        %v503 = vunpack.c.h.b16 %v346
        %v504 = vunpack.c.l.b16 %v347
        %v505 = vunpack.c.l.b16 %v348
        %v506 = vunpack.c.h.b16 %v348
        %v507 = vunpack.c.l.b16 %v349
        %v508 = vunpack.c.l.b16 %v350
        %v509 = vunpack.c.h.b16 %v350
        %v510 = vunpack.c.l.b16 %v351
        %v511 = vunpack.c.l.b16 %v352
        %v512 = vunpack.c.h.b16 %v352
        %v513 = vunpack.c.l.b16 %v353
        %v514 = vunpack.c.l.b16 %v354
        %v515 = vunpack.c.h.b16 %v354
        %v516 = vunpack.c.l.b16 %v355
        %v517 = vunpack.c.l.b16 %v356
        %v518 = vunpack.c.h.b16 %v356
        %v519 = vunpack.c.l.b16 %v357
        %v520 = vunpack.c.l.b16 %v358
        %v521 = vunpack.c.h.b16 %v358
        %v522 = vunpack.c.l.b16 %v359
        %v523 = vunpack.c.l.b16 %v360
        %v524 = vunpack.c.h.b16 %v360
        %v525 = vunpack.c.l.b16 %v361
        %v526 = vunpack.c.l.b16 %v362
        %v527 = vunpack.c.h.b16 %v362
        %v528 = vunpack.c.l.b16 %v363
        %v529 = vunpack.c.l.b16 %v364
        %v530 = vunpack.c.h.b16 %v364
        %v531 = vunpack.c.l.b16 %v365
        %v532 = vunpack.c.l.b16 %v366
        %v533 = vunpack.c.h.b16 %v366
        %v534 = vunpack.c.l.b16 %v367
        %v535 = vunpack.c.l.b16 %v368
        %v536 = vunpack.c.h.b16 %v368
        %v537 = vunpack.c.l.b16 %v369
        %v538 = vunpack.c.l.b16 %v370
        %v539 = vunpack.c.h.b16 %v370
        %v540 = vunpack.c.l.b16 %v371
        %v541 = vunpack.c.l.b16 %v372
        %v542 = vunpack.c.h.b16 %v372
        %v543 = vunpack.c.l.b16 %v373
        %v544 = vpack.c.b16 %v499, %v496
        %v545 = vpack.c.b16 %v500, %v497
        %v546 = vpack.c.b16 %v501, %v498
        %v547 = vpack.c.b16 %v505, %v502
        %v548 = vpack.c.b16 %v506, %v503
        %v549 = vpack.c.b16 %v507, %v504
        %v550 = vpack.c.b16 %v511, %v508
        %v551 = vpack.c.b16 %v512, %v509
        %v552 = vpack.c.b16 %v513, %v510
        %v553 = vpack.c.b16 %v517, %v514
        %v554 = vpack.c.b16 %v518, %v515
        %v555 = vpack.c.b16 %v519, %v516
        %v556 = vpack.c.b16 %v523, %v520
        %v557 = vpack.c.b16 %v524, %v521
        %v558 = vpack.c.b16 %v525, %v522
        %v559 = vpack.c.b16 %v529, %v526
        %v560 = vpack.c.b16 %v530, %v527
        %v561 = vpack.c.b16 %v531, %v528
        %v562 = vpack.c.b16 %v535, %v532
        %v563 = vpack.c.b16 %v536, %v533
        %v564 = vpack.c.b16 %v537, %v534
        %v565 = vpack.c.b16 %v541, %v538
        %v566 = vpack.c.b16 %v542, %v539
        %v567 = vpack.c.b16 %v543, %v540
        %592 = vmatprep.subr.bf16.mxu0 %v545
        %593 = vmatpush1.bf16.msra.mxu0 %v544
        %594 = vmatprep.subr.bf16.mxu0 %v548
        %595 = vmatpush1.bf16.msra.mxu0 %v547
        %596 = vmatprep.subr.bf16.mxu0 %v551
        %597 = vmatpush1.bf16.msra.mxu0 %v550
        %598 = vmatprep.subr.bf16.mxu0 %v554
        %599 = vmatpush1.bf16.msra.mxu0 %v553
        %600 = vmatprep.subr.bf16.mxu0 %v557
        %601 = vmatpush1.bf16.msra.mxu0 %v556
        %602 = vmatprep.subr.bf16.mxu0 %v560
        %603 = vmatpush1.bf16.msra.mxu0 %v559
        %604 = vmatprep.subr.bf16.mxu0 %v563
        %605 = vmatpush1.bf16.msra.mxu0 %v562
        %606 = vmatprep.subr.bf16.mxu0 %v566
        %607 = vmatpush1.bf16.msra.mxu0 %v565
        %608 = vmatprep.subr.bf16.mxu0 0
        %609 = vmatpush1.bf16.msra.mxu0 0
        %610 = vmatprep.subr.bf16.mxu0 0
        %611 = vmatpush1.bf16.msra.mxu0 0
        %612 = vmatprep.subr.bf16.mxu0 0
        %613 = vmatpush1.bf16.msra.mxu0 0
        %614 = vmatprep.subr.bf16.mxu0 0
        %615 = vmatpush1.bf16.msra.mxu0 0
        %616 = vmatprep.subr.bf16.mxu0 0
        %617 = vmatpush1.bf16.msra.mxu0 0
        %618 = vmatprep.subr.bf16.mxu0 0
        %619 = vmatpush1.bf16.msra.mxu0 0
        %620 = vmatprep.subr.bf16.mxu0 0
        %621 = vmatpush1.bf16.msra.mxu0 0
        %622 = vmatprep.subr.bf16.mxu0 0
        %623 = vmatpush1.bf16.msra.mxu0 0
        %624 = vmatprep.mubr.bf16.mxu0 0
        %625 = vmatmul.mubr.bf16.gmra.mrb[0].mxu0 %v434
        %v626 = vpop.f32.mrb[0].mxu0
        %v627 = vadd.f32 0.0, %v626
        %v628 = vpop.f32.mrb[0].mxu0
        %v629 = vpop.f32.mrb[0].mxu0
        %v630 = vadd.f32 0.0, %v629
        %v631 = vpop.f32.mrb[0].mxu0
        %632 = vmatprep.mubr.bf16.mxu0 0
        %633 = vmatmul.mubr.bf16.gmra.mrb[0].mxu0 %v435
        %v634 = vpop.f32.mrb[0].mxu0
        %v635 = vadd.f32 0.0, %v634
        %v636 = vpop.f32.mrb[0].mxu0
        %v637 = vpop.f32.mrb[0].mxu0
        %v638 = vadd.f32 0.0, %v637
        %v639 = vpop.f32.mrb[0].mxu0
        %v640 = vadd.f32 0.0, %v639
        %641 = vmatprep.mubr.bf16.mxu0 0
        %642 = vmatmul.mubr.bf16.gmra.mrb[0].mxu0 %v436
        %v643 = vpop.f32.mrb[0].mxu0
        %v644 = vadd.f32 0.0, %v643
        %v645 = vpop.f32.mrb[0].mxu0
        %v646 = vadd.f32 0.0, %v645
        %v647 = vpop.f32.mrb[0].mxu0
        %v648 = vadd.f32 0.0, %v647
        %v649 = vpop.f32.mrb[0].mxu0
        %v650 = vadd.f32 0.0, %v649
        %651 = vmatprep.mubr.bf16.mxu0 0
        %652 = vmatmul.mubr.bf16.gmra.mrb[0].mxu0 %v437
        %v653 = vpop.f32.mrb[0].mxu0
        %v654 = vadd.f32 0.0, %v653
        %v655 = vpop.f32.mrb[0].mxu0
        %v656 = vadd.f32 0.0, %v655
        %v657 = vpop.f32.mrb[0].mxu0
        %v658 = vadd.f32 0.0, %v657
        %v659 = vpop.f32.mrb[0].mxu0
        %v660 = vadd.f32 0.0, %v659
        %661 = vmatprep.mubr.bf16.mxu0 0
        %662 = vmatmul.mubr.bf16.gmra.mrb[0].mxu0 %v438
        %v663 = vpop.f32.mrb[0].mxu0
        %v664 = vadd.f32 0.0, %v663
        %v665 = vpop.f32.mrb[0].mxu0
        %v666 = vadd.f32 0.0, %v665
        %v667 = vpop.f32.mrb[0].mxu0
        %v668 = vadd.f32 0.0, %v667
        %v669 = vpop.f32.mrb[0].mxu0
        %v670 = vadd.f32 0.0, %v669
        %671 = vmatprep.mubr.bf16.mxu0 0
        %672 = vmatmul.mubr.bf16.gmra.mrb[0].mxu0 %v439
        %v673 = vpop.f32.mrb[0].mxu0
        %v674 = vadd.f32 0.0, %v673
        %v675 = vpop.f32.mrb[0].mxu0
        %v676 = vadd.f32 0.0, %v675
        %v677 = vpop.f32.mrb[0].mxu0
        %v678 = vadd.f32 0.0, %v677
        %v679 = vpop.f32.mrb[0].mxu0
        %v680 = vadd.f32 0.0, %v679
        %681 = vmatprep.mubr.bf16.mxu0 0
        %682 = vmatmul.mubr.bf16.gmra.mrb[0].mxu0 %v440
        %v683 = vpop.f32.mrb[0].mxu0
        %v684 = vadd.f32 0.0, %v683
        %v685 = vpop.f32.mrb[0].mxu0
        %v686 = vadd.f32 0.0, %v685
        %v687 = vpop.f32.mrb[0].mxu0
        %v688 = vadd.f32 0.0, %v687
        %v689 = vpop.f32.mrb[0].mxu0
        %v690 = vadd.f32 0.0, %v689
        %691 = vmatprep.mubr.bf16.mxu0 0
        %692 = vmatmul.mubr.bf16.gmra.mrb[0].mxu0 %v441
        %v693 = vpop.f32.mrb[0].mxu0
        %v694 = vadd.f32 0.0, %v693
        %v695 = vpop.f32.mrb[0].mxu0
        %v696 = vadd.f32 0.0, %v695
        %v697 = vpop.f32.mrb[0].mxu0
        %v698 = vadd.f32 0.0, %v697
        %v699 = vpop.f32.mrb[0].mxu0
        %v700 = vadd.f32 0.0, %v699
        %701 = vmatprep.mubr.bf16.mxu0 0
        %702 = vmatmul.mubr.bf16.gmra.mrb[0].mxu0 %v442
        %v703 = vpop.f32.mrb[0].mxu0
        %v704 = vadd.f32 0.0, %v703
        %v705 = vpop.f32.mrb[0].mxu0
        %v706 = vadd.f32 0.0, %v705
        %v707 = vpop.f32.mrb[0].mxu0
        %v708 = vadd.f32 0.0, %v707
        %v709 = vpop.f32.mrb[0].mxu0
        %v710 = vadd.f32 0.0, %v709
        %711 = vmatprep.mubr.bf16.mxu0 0
        %712 = vmatmul.mubr.bf16.gmra.mrb[0].mxu0 %v443
        %v713 = vpop.f32.mrb[0].mxu0
        %v714 = vadd.f32 0.0, %v713
        %v715 = vpop.f32.mrb[0].mxu0
        %v716 = vadd.f32 0.0, %v715
        %v717 = vpop.f32.mrb[0].mxu0
        %v718 = vadd.f32 0.0, %v717
        %v719 = vpop.f32.mrb[0].mxu0
        %v720 = vadd.f32 0.0, %v719
        %721 = vmatprep.mubr.bf16.mxu0 0
        %722 = vmatmul.mubr.bf16.gmra.mrb[0].mxu0 %v444
        %v723 = vpop.f32.mrb[0].mxu0
        %v724 = vadd.f32 0.0, %v723
        %v725 = vpop.f32.mrb[0].mxu0
        %v726 = vadd.f32 0.0, %v725
        %v727 = vpop.f32.mrb[0].mxu0
        %v728 = vadd.f32 0.0, %v727
        %v729 = vpop.f32.mrb[0].mxu0
        %v730 = vadd.f32 0.0, %v729
        %731 = vmatprep.mubr.bf16.mxu0 0
        %732 = vmatmul.mubr.bf16.gmra.mrb[0].mxu0 %v445
        %v733 = vpop.f32.mrb[0].mxu0
        %v734 = vadd.f32 0.0, %v733
        %v735 = vpop.f32.mrb[0].mxu0
        %v736 = vadd.f32 0.0, %v735
        %v737 = vpop.f32.mrb[0].mxu0
        %v738 = vadd.f32 0.0, %v737
        %v739 = vpop.f32.mrb[0].mxu0
        %v740 = vadd.f32 0.0, %v739
        %741 = vmatprep.mubr.bf16.mxu0 0
        %742 = vmatmul.mubr.bf16.gmra.mrb[0].mxu0 %v446
        %v743 = vpop.f32.mrb[0].mxu0
        %v744 = vadd.f32 0.0, %v743
        %v745 = vpop.f32.mrb[0].mxu0
        %v746 = vadd.f32 0.0, %v745
        %v747 = vpop.f32.mrb[0].mxu0
        %v748 = vadd.f32 0.0, %v747
        %v749 = vpop.f32.mrb[0].mxu0
        %v750 = vadd.f32 0.0, %v749
        %751 = vmatprep.mubr.bf16.mxu0 0
        %752 = vmatmul.mubr.bf16.gmra.mrb[0].mxu0 %v447
        %v753 = vpop.f32.mrb[0].mxu0
        %v754 = vpop.f32.mrb[0].mxu0
        %v755 = vadd.f32 0.0, %v754
        %v756 = vpop.f32.mrb[0].mxu0
        %v757 = vpop.f32.mrb[0].mxu0
        %v758 = vadd.f32 0.0, %v757
        %759 = vmatprep.mubr.bf16.mxu0 0
        %760 = vmatmul.mubr.bf16.gmra.mrb[0].mxu0 %v448
        %v761 = vpop.f32.mrb[0].mxu0
        %v762 = vpop.f32.mrb[0].mxu0
        %v763 = vadd.f32 0.0, %v762
        %v764 = vpop.f32.mrb[0].mxu0
        %v765 = vpop.f32.mrb[0].mxu0
        %v766 = vadd.f32 0.0, %v765
        %767 = vdwg.mxu0
        %768 = vmatprep.subr.bf16.mxu0 0
        %769 = vmatpush1.bf16.msra.mxu0 %v546
        %770 = vmatprep.subr.bf16.mxu0 0
        %771 = vmatpush1.bf16.msra.mxu0 %v549
        %772 = vmatprep.subr.bf16.mxu0 0
        %773 = vmatpush1.bf16.msra.mxu0 %v552
        %774 = vmatprep.subr.bf16.mxu0 0
        %775 = vmatpush1.bf16.msra.mxu0 %v555
        %776 = vmatprep.subr.bf16.mxu0 0
        %777 = vmatpush1.bf16.msra.mxu0 %v558
        %778 = vmatprep.subr.bf16.mxu0 0
        %779 = vmatpush1.bf16.msra.mxu0 %v561
        %780 = vmatprep.subr.bf16.mxu0 0
        %781 = vmatpush1.bf16.msra.mxu0 %v564
        %782 = vmatprep.subr.bf16.mxu0 0
        %783 = vmatpush1.bf16.msra.mxu0 %v567
        %784 = vmatprep.subr.bf16.mxu0 0
        %785 = vmatpush1.bf16.msra.mxu0 0
        %786 = vmatprep.subr.bf16.mxu0 0
        %787 = vmatpush1.bf16.msra.mxu0 0
        %788 = vmatprep.subr.bf16.mxu0 0
        %789 = vmatpush1.bf16.msra.mxu0 0
        %790 = vmatprep.subr.bf16.mxu0 0
        %791 = vmatpush1.bf16.msra.mxu0 0
        %792 = vmatprep.subr.bf16.mxu0 0
        %793 = vmatpush1.bf16.msra.mxu0 0
        %794 = vmatprep.subr.bf16.mxu0 0
        %795 = vmatpush1.bf16.msra.mxu0 0
        %796 = vmatprep.subr.bf16.mxu0 0
        %797 = vmatpush1.bf16.msra.mxu0 0
        %798 = vmatprep.subr.bf16.mxu0 0
        %799 = vmatpush1.bf16.msra.mxu0 0
        %800 = vmatprep.mubr.bf16.mxu0 0
        %801 = vmatmul.mubr.bf16.gmra.mrb[0].mxu0 %v434
        %v802 = vpop.f32.mrb[0].mxu0
        %v803 = vpop.f32.mrb[0].mxu0
        %v804 = vpop.f32.mrb[0].mxu0
        %v805 = vpop.f32.mrb[0].mxu0
        %806 = vmatprep.mubr.bf16.mxu0 0
        %807 = vmatmul.mubr.bf16.gmra.mrb[0].mxu0 %v435
        %v808 = vpop.f32.mrb[0].mxu0
        %v809 = vpop.f32.mrb[0].mxu0
        %v810 = vpop.f32.mrb[0].mxu0
        %v811 = vpop.f32.mrb[0].mxu0
        %812 = vmatprep.mubr.bf16.mxu0 0
        %813 = vmatmul.mubr.bf16.gmra.mrb[0].mxu0 %v436
        %v814 = vpop.f32.mrb[0].mxu0
        %v815 = vpop.f32.mrb[0].mxu0
        %v816 = vpop.f32.mrb[0].mxu0
        %v817 = vpop.f32.mrb[0].mxu0
        %818 = vmatprep.mubr.bf16.mxu0 0
        %819 = vmatmul.mubr.bf16.gmra.mrb[0].mxu0 %v437
        %v820 = vpop.f32.mrb[0].mxu0
        %v821 = vadd.f32 0.0, %v820
        %v822 = vpop.f32.mrb[0].mxu0
        %v823 = vpop.f32.mrb[0].mxu0
        %v824 = vadd.f32 0.0, %v823
        %v825 = vpop.f32.mrb[0].mxu0
        %826 = vmatprep.mubr.bf16.mxu0 0
        %827 = vmatmul.mubr.bf16.gmra.mrb[0].mxu0 %v438
        %v828 = vpop.f32.mrb[0].mxu0
        %v829 = vadd.f32 0.0, %v828
        %v830 = vpop.f32.mrb[0].mxu0
        %v831 = vpop.f32.mrb[0].mxu0
        %v832 = vadd.f32 0.0, %v831
        %v833 = vpop.f32.mrb[0].mxu0
        %834 = vmatprep.mubr.bf16.mxu0 0
        %835 = vmatmul.mubr.bf16.gmra.mrb[0].mxu0 %v439
        %v836 = vpop.f32.mrb[0].mxu0
        %v837 = vadd.f32 0.0, %v836
        %v838 = vpop.f32.mrb[0].mxu0
        %v839 = vpop.f32.mrb[0].mxu0
        %v840 = vadd.f32 0.0, %v839
        %v841 = vpop.f32.mrb[0].mxu0
        %842 = vmatprep.mubr.bf16.mxu0 0
        %843 = vmatmul.mubr.bf16.gmra.mrb[0].mxu0 %v440
        %v844 = vpop.f32.mrb[0].mxu0
        %v845 = vadd.f32 0.0, %v844
        %v846 = vpop.f32.mrb[0].mxu0
        %v847 = vpop.f32.mrb[0].mxu0
        %v848 = vadd.f32 0.0, %v847
        %v849 = vpop.f32.mrb[0].mxu0
        %850 = vmatprep.mubr.bf16.mxu0 0
        %851 = vmatmul.mubr.bf16.gmra.mrb[0].mxu0 %v441
        %v852 = vpop.f32.mrb[0].mxu0
        %v853 = vadd.f32 0.0, %v852
        %v854 = vpop.f32.mrb[0].mxu0
        %v855 = vpop.f32.mrb[0].mxu0
        %v856 = vadd.f32 0.0, %v855
        %v857 = vpop.f32.mrb[0].mxu0
        %858 = vmatprep.mubr.bf16.mxu0 0
        %859 = vmatmul.mubr.bf16.gmra.mrb[0].mxu0 %v442
        %v860 = vpop.f32.mrb[0].mxu0
        %v861 = vadd.f32 0.0, %v860
        %v862 = vpop.f32.mrb[0].mxu0
        %v863 = vpop.f32.mrb[0].mxu0
        %v864 = vadd.f32 0.0, %v863
        %v865 = vpop.f32.mrb[0].mxu0
        %866 = vmatprep.mubr.bf16.mxu0 0
        %867 = vmatmul.mubr.bf16.gmra.mrb[0].mxu0 %v443
        %v868 = vpop.f32.mrb[0].mxu0
        %v869 = vadd.f32 0.0, %v868
        %v870 = vpop.f32.mrb[0].mxu0
        %v871 = vpop.f32.mrb[0].mxu0
        %v872 = vadd.f32 0.0, %v871
        %v873 = vpop.f32.mrb[0].mxu0
        %874 = vmatprep.mubr.bf16.mxu0 0
        %875 = vmatmul.mubr.bf16.gmra.mrb[0].mxu0 %v444
        %v876 = vpop.f32.mrb[0].mxu0
        %v877 = vadd.f32 0.0, %v876
        %v878 = vpop.f32.mrb[0].mxu0
        %v879 = vpop.f32.mrb[0].mxu0
        %v880 = vadd.f32 0.0, %v879
        %v881 = vpop.f32.mrb[0].mxu0
        %882 = vmatprep.mubr.bf16.mxu0 0
        %883 = vmatmul.mubr.bf16.gmra.mrb[0].mxu0 %v445
        %v884 = vpop.f32.mrb[0].mxu0
        %v885 = vadd.f32 0.0, %v884
        %v886 = vpop.f32.mrb[0].mxu0
        %v887 = vpop.f32.mrb[0].mxu0
        %v888 = vadd.f32 0.0, %v887
        %v889 = vpop.f32.mrb[0].mxu0
        %890 = vmatprep.mubr.bf16.mxu0 0
        %891 = vmatmul.mubr.bf16.gmra.mrb[0].mxu0 %v446
        %v892 = vpop.f32.mrb[0].mxu0
        %v893 = vadd.f32 0.0, %v892
        %v894 = vpop.f32.mrb[0].mxu0
        %v895 = vpop.f32.mrb[0].mxu0
        %v896 = vadd.f32 0.0, %v895
        %v897 = vpop.f32.mrb[0].mxu0
        %898 = vmatprep.mubr.bf16.mxu0 0
        %899 = vmatmul.mubr.bf16.gmra.mrb[0].mxu0 %v447
        %v900 = vpop.f32.mrb[0].mxu0
        %v901 = vadd.f32 0.0, %v900
        %v902 = vpop.f32.mrb[0].mxu0
        %v903 = vpop.f32.mrb[0].mxu0
        %v904 = vadd.f32 0.0, %v903
        %v905 = vpop.f32.mrb[0].mxu0
        %906 = vmatprep.mubr.bf16.mxu0 0
        %907 = vmatmul.mubr.bf16.gmra.mrb[0].mxu0 %v448
        %v908 = vpop.f32.mrb[0].mxu0
        %v909 = vadd.f32 0.0, %v908
        %v910 = vpop.f32.mrb[0].mxu0
        %v911 = vpop.f32.mrb[0].mxu0
        %v912 = vadd.f32 0.0, %v911
        %v913 = vpop.f32.mrb[0].mxu0
        %914 = vdwg.mxu0
        %v915 = vadd.f32 %v627, 0.0
        %v916 = vadd.f32 %v630, 0.0
        %v917 = vadd.f32 %v638, 0.0
        %v918 = vadd.f32 %v644, 0.0
        %v919 = vadd.f32 %v654, 0.0
        %v920 = vadd.f32 %v658, 0.0
        %v921 = vadd.f32 %v668, 0.0
        %v922 = vadd.f32 %v674, 0.0
        %v923 = vadd.f32 %v684, 0.0
        %v924 = vadd.f32 %v688, 0.0
        %v925 = vadd.f32 %v698, 0.0
        %v926 = vadd.f32 %v704, 0.0
        %v927 = vadd.f32 %v714, 0.0
        %v928 = vadd.f32 %v718, 0.0
        %v929 = vadd.f32 %v728, 0.0
        %v930 = vadd.f32 %v734, 0.0
        %vm955 = vcmask 1046528
        %v956 = vrot.slane %v627, 1
        %v957 = vrot.slane %v630, 1
        %v958 = vsel %vm955, %v956, %v957
        %v959 = vrot.slane %v635, 1
        %v960 = vsel %vm955, %v957, %v959
        %v961 = vrot.slane %v638, 1
        %v962 = vrot.slane %v644, 1
        %v963 = vsel %vm955, %v961, %v962
        %v964 = vrot.slane %v648, 1
        %v965 = vsel %vm955, %v962, %v964
        %v966 = vrot.slane %v654, 1
        %v967 = vrot.slane %v658, 1
        %v968 = vsel %vm955, %v966, %v967
        %v969 = vrot.slane %v664, 1
        %v970 = vsel %vm955, %v967, %v969
        %v971 = vrot.slane %v668, 1
        %v972 = vrot.slane %v674, 1
        %v973 = vsel %vm955, %v971, %v972
        %v974 = vrot.slane %v678, 1
        %v975 = vsel %vm955, %v972, %v974
        %v976 = vrot.slane %v684, 1
        %v977 = vrot.slane %v688, 1
        %v978 = vsel %vm955, %v976, %v977
        %v979 = vrot.slane %v694, 1
        %v980 = vsel %vm955, %v977, %v979
        %v981 = vrot.slane %v698, 1
        %v982 = vrot.slane %v704, 1
        %v983 = vsel %vm955, %v981, %v982
        %v984 = vrot.slane %v708, 1
        %v985 = vsel %vm955, %v982, %v984
        %v986 = vrot.slane %v714, 1
        %v987 = vrot.slane %v718, 1
        %v988 = vsel %vm955, %v986, %v987
        %v989 = vrot.slane %v724, 1
        %v990 = vsel %vm955, %v987, %v989
        %v991 = vrot.slane %v728, 1
        %v992 = vrot.slane %v734, 1
        %v993 = vsel %vm955, %v991, %v992
        %v994 = vrot.slane %v738, 1
        %v995 = vsel %vm955, %v992, %v994
        %996 = vrot.lane.b32.xlu0 %v958, 96
        %v997 = vpop.permute.xlu0 %996
        %998 = vrot.lane.b32.xlu0 %v960, 96
        %v999 = vpop.permute.xlu0 %998
        %1000 = vrot.lane.b32.xlu0 %v963, 96
        %v1001 = vpop.permute.xlu0 %1000
        %1002 = vrot.lane.b32.xlu0 %v965, 96
        %v1003 = vpop.permute.xlu0 %1002
        %1004 = vrot.lane.b32.xlu0 %v968, 96
        %v1005 = vpop.permute.xlu0 %1004
        %1006 = vrot.lane.b32.xlu0 %v970, 96
        %v1007 = vpop.permute.xlu0 %1006
        %1008 = vrot.lane.b32.xlu0 %v973, 96
        %v1009 = vpop.permute.xlu0 %1008
        %1010 = vrot.lane.b32.xlu0 %v975, 96
        %v1011 = vpop.permute.xlu0 %1010
        %1012 = vrot.lane.b32.xlu0 %v978, 96
        %v1013 = vpop.permute.xlu0 %1012
        %1014 = vrot.lane.b32.xlu0 %v980, 96
        %v1015 = vpop.permute.xlu0 %1014
        %1016 = vrot.lane.b32.xlu0 %v983, 96
        %v1017 = vpop.permute.xlu0 %1016
        %1018 = vrot.lane.b32.xlu0 %v985, 96
        %v1019 = vpop.permute.xlu0 %1018
        %1020 = vrot.lane.b32.xlu0 %v988, 96
        %v1021 = vpop.permute.xlu0 %1020
        %1022 = vrot.lane.b32.xlu0 %v990, 96
        %v1023 = vpop.permute.xlu0 %1022
        %1024 = vrot.lane.b32.xlu0 %v993, 96
        %v1025 = vpop.permute.xlu0 %1024
        %1026 = vrot.lane.b32.xlu0 %v995, 96
        %v1027 = vpop.permute.xlu0 %1026
        %v1044 = vadd.f32 %v915, %v997
        %v1045 = vadd.f32 %v916, %v999
        %v1046 = vadd.f32 %v917, %v1001
        %v1047 = vadd.f32 %v918, %v1003
        %v1048 = vadd.f32 %v919, %v1005
        %v1049 = vadd.f32 %v920, %v1007
        %v1050 = vadd.f32 %v921, %v1009
        %v1051 = vadd.f32 %v922, %v1011
        %v1052 = vadd.f32 %v923, %v1013
        %v1053 = vadd.f32 %v924, %v1015
        %v1054 = vadd.f32 %v925, %v1017
        %v1055 = vadd.f32 %v926, %v1019
        %v1056 = vadd.f32 %v927, %v1021
        %v1057 = vadd.f32 %v928, %v1023
        %v1058 = vadd.f32 %v929, %v1025
        %v1059 = vadd.f32 %v930, %v1027
        %vm1060 = vcmask 1045504
        %v1061 = vrot.slane %v627, 2
        %v1062 = vrot.slane %v630, 2
        %v1063 = vsel %vm1060, %v1061, %v1062
        %v1064 = vrot.slane %v635, 2
        %v1065 = vsel %vm1060, %v1062, %v1064
        %v1066 = vrot.slane %v638, 2
        %v1067 = vrot.slane %v644, 2
        %v1068 = vsel %vm1060, %v1066, %v1067
        %v1069 = vrot.slane %v648, 2
        %v1070 = vsel %vm1060, %v1067, %v1069
        %v1071 = vrot.slane %v654, 2
        %v1072 = vrot.slane %v658, 2
        %v1073 = vsel %vm1060, %v1071, %v1072
        %v1074 = vrot.slane %v664, 2
        %v1075 = vsel %vm1060, %v1072, %v1074
        %v1076 = vrot.slane %v668, 2
        %v1077 = vrot.slane %v674, 2
        %v1078 = vsel %vm1060, %v1076, %v1077
        %v1079 = vrot.slane %v678, 2
        %v1080 = vsel %vm1060, %v1077, %v1079
        %v1081 = vrot.slane %v684, 2
        %v1082 = vrot.slane %v688, 2
        %v1083 = vsel %vm1060, %v1081, %v1082
        %v1084 = vrot.slane %v694, 2
        %v1085 = vsel %vm1060, %v1082, %v1084
        %v1086 = vrot.slane %v698, 2
        %v1087 = vrot.slane %v704, 2
        %v1088 = vsel %vm1060, %v1086, %v1087
        %v1089 = vrot.slane %v708, 2
        %v1090 = vsel %vm1060, %v1087, %v1089
        %v1091 = vrot.slane %v714, 2
        %v1092 = vrot.slane %v718, 2
        %v1093 = vsel %vm1060, %v1091, %v1092
        %v1094 = vrot.slane %v724, 2
        %v1095 = vsel %vm1060, %v1092, %v1094
        %v1096 = vrot.slane %v728, 2
        %v1097 = vrot.slane %v734, 2
        %v1098 = vsel %vm1060, %v1096, %v1097
        %v1099 = vrot.slane %v738, 2
        %v1100 = vsel %vm1060, %v1097, %v1099
        %1101 = vrot.lane.b32.xlu0 %v1063, 64
        %v1102 = vpop.permute.xlu0 %1101
        %1103 = vrot.lane.b32.xlu0 %v1065, 64
        %v1104 = vpop.permute.xlu0 %1103
        %1105 = vrot.lane.b32.xlu0 %v1068, 64
        %v1106 = vpop.permute.xlu0 %1105
        %1107 = vrot.lane.b32.xlu0 %v1070, 64
        %v1108 = vpop.permute.xlu0 %1107
        %1109 = vrot.lane.b32.xlu0 %v1073, 64
        %v1110 = vpop.permute.xlu0 %1109
        %1111 = vrot.lane.b32.xlu0 %v1075, 64
        %v1112 = vpop.permute.xlu0 %1111
        %1113 = vrot.lane.b32.xlu0 %v1078, 64
        %v1114 = vpop.permute.xlu0 %1113
        %1115 = vrot.lane.b32.xlu0 %v1080, 64
        %v1116 = vpop.permute.xlu0 %1115
        %1117 = vrot.lane.b32.xlu0 %v1083, 64
        %v1118 = vpop.permute.xlu0 %1117
        %1119 = vrot.lane.b32.xlu0 %v1085, 64
        %v1120 = vpop.permute.xlu0 %1119
        %1121 = vrot.lane.b32.xlu0 %v1088, 64
        %v1122 = vpop.permute.xlu0 %1121
        %1123 = vrot.lane.b32.xlu0 %v1090, 64
        %v1124 = vpop.permute.xlu0 %1123
        %1125 = vrot.lane.b32.xlu0 %v1093, 64
        %v1126 = vpop.permute.xlu0 %1125
        %1127 = vrot.lane.b32.xlu0 %v1095, 64
        %v1128 = vpop.permute.xlu0 %1127
        %1129 = vrot.lane.b32.xlu0 %v1098, 64
        %v1130 = vpop.permute.xlu0 %1129
        %1131 = vrot.lane.b32.xlu0 %v1100, 64
        %v1132 = vpop.permute.xlu0 %1131
        %v1149 = vadd.f32 %v1044, %v1102
        %v1150 = vadd.f32 %v1045, %v1104
        %v1151 = vadd.f32 %v1046, %v1106
        %v1152 = vadd.f32 %v1047, %v1108
        %v1153 = vadd.f32 %v1048, %v1110
        %v1154 = vadd.f32 %v1049, %v1112
        %v1155 = vadd.f32 %v1050, %v1114
        %v1156 = vadd.f32 %v1051, %v1116
        %v1157 = vadd.f32 %v1052, %v1118
        %v1158 = vadd.f32 %v1053, %v1120
        %v1159 = vadd.f32 %v1054, %v1122
        %v1160 = vadd.f32 %v1055, %v1124
        %v1161 = vadd.f32 %v1056, %v1126
        %v1162 = vadd.f32 %v1057, %v1128
        %v1163 = vadd.f32 %v1058, %v1130
        %v1164 = vadd.f32 %v1059, %v1132
        %1167 = vrot.lane.b32.xlu0 %v638, 32
        %v1168 = vpop.permute.xlu0 %1167
        %1169 = vrot.lane.b32.xlu0 %v644, 32
        %v1170 = vpop.permute.xlu0 %1169
        %1171 = vrot.lane.b32.xlu0 %v654, 32
        %v1172 = vpop.permute.xlu0 %1171
        %1173 = vrot.lane.b32.xlu0 %v658, 32
        %v1174 = vpop.permute.xlu0 %1173
        %1175 = vrot.lane.b32.xlu0 %v668, 32
        %v1176 = vpop.permute.xlu0 %1175
        %1177 = vrot.lane.b32.xlu0 %v674, 32
        %v1178 = vpop.permute.xlu0 %1177
        %1179 = vrot.lane.b32.xlu0 %v684, 32
        %v1180 = vpop.permute.xlu0 %1179
        %1181 = vrot.lane.b32.xlu0 %v688, 32
        %v1182 = vpop.permute.xlu0 %1181
        %1183 = vrot.lane.b32.xlu0 %v698, 32
        %v1184 = vpop.permute.xlu0 %1183
        %1185 = vrot.lane.b32.xlu0 %v704, 32
        %v1186 = vpop.permute.xlu0 %1185
        %1187 = vrot.lane.b32.xlu0 %v714, 32
        %v1188 = vpop.permute.xlu0 %1187
        %1189 = vrot.lane.b32.xlu0 %v718, 32
        %v1190 = vpop.permute.xlu0 %1189
        %1191 = vrot.lane.b32.xlu0 %v728, 32
        %v1192 = vpop.permute.xlu0 %1191
        %1193 = vrot.lane.b32.xlu0 %v734, 32
        %v1194 = vpop.permute.xlu0 %1193
        %1195 = vrot.lane.b32.xlu0 %v744, 32
        %v1196 = vpop.permute.xlu0 %1195
        %1197 = vrot.lane.b32.xlu0 %v748, 32
        %v1198 = vpop.permute.xlu0 %1197
        %v1215 = vadd.f32 %v1149, %v1168
        %v1216 = vadd.f32 %v1150, %v1170
        %v1217 = vadd.f32 %v1151, %v1172
        %v1218 = vadd.f32 %v1152, %v1174
        %v1219 = vadd.f32 %v1153, %v1176
        %v1220 = vadd.f32 %v1154, %v1178
        %v1221 = vadd.f32 %v1155, %v1180
        %v1222 = vadd.f32 %v1156, %v1182
        %v1223 = vadd.f32 %v1157, %v1184
        %v1224 = vadd.f32 %v1158, %v1186
        %v1225 = vadd.f32 %v1159, %v1188
        %v1226 = vadd.f32 %v1160, %v1190
        %v1227 = vadd.f32 %v1161, %v1192
        %v1228 = vadd.f32 %v1162, %v1194
        %v1229 = vadd.f32 %v1163, %v1196
        %v1230 = vadd.f32 %v1164, %v1198
        %v1255 = vrot.slane %v640, 1
        %v1256 = vrot.slane %v646, 1
        %v1257 = vsel %vm955, %v1255, %v1256
        %v1258 = vrot.slane %v650, 1
        %v1259 = vsel %vm955, %v1256, %v1258
        %v1260 = vrot.slane %v656, 1
        %v1261 = vrot.slane %v660, 1
        %v1262 = vsel %vm955, %v1260, %v1261
        %v1263 = vrot.slane %v666, 1
        %v1264 = vsel %vm955, %v1261, %v1263
        %v1265 = vrot.slane %v670, 1
        %v1266 = vrot.slane %v676, 1
        %v1267 = vsel %vm955, %v1265, %v1266
        %v1268 = vrot.slane %v680, 1
        %v1269 = vsel %vm955, %v1266, %v1268
        %v1270 = vrot.slane %v686, 1
        %v1271 = vrot.slane %v690, 1
        %v1272 = vsel %vm955, %v1270, %v1271
        %v1273 = vrot.slane %v696, 1
        %v1274 = vsel %vm955, %v1271, %v1273
        %v1275 = vrot.slane %v700, 1
        %v1276 = vrot.slane %v706, 1
        %v1277 = vsel %vm955, %v1275, %v1276
        %v1278 = vrot.slane %v710, 1
        %v1279 = vsel %vm955, %v1276, %v1278
        %v1280 = vrot.slane %v716, 1
        %v1281 = vrot.slane %v720, 1
        %v1282 = vsel %vm955, %v1280, %v1281
        %v1283 = vrot.slane %v726, 1
        %v1284 = vsel %vm955, %v1281, %v1283
        %v1285 = vrot.slane %v730, 1
        %v1286 = vrot.slane %v736, 1
        %v1287 = vsel %vm955, %v1285, %v1286
        %v1288 = vrot.slane %v740, 1
        %v1289 = vsel %vm955, %v1286, %v1288
        %v1290 = vrot.slane %v746, 1
        %v1291 = vrot.slane %v750, 1
        %v1292 = vsel %vm955, %v1290, %v1291
        %v1293 = vrot.slane %v755, 1
        %v1294 = vsel %vm955, %v1291, %v1293
        %v1311 = vadd.f32 %v1215, %v1257
        %v1312 = vadd.f32 %v1216, %v1259
        %v1313 = vadd.f32 %v1217, %v1262
        %v1314 = vadd.f32 %v1218, %v1264
        %v1315 = vadd.f32 %v1219, %v1267
        %v1316 = vadd.f32 %v1220, %v1269
        %v1317 = vadd.f32 %v1221, %v1272
        %v1318 = vadd.f32 %v1222, %v1274
        %v1319 = vadd.f32 %v1223, %v1277
        %v1320 = vadd.f32 %v1224, %v1279
        %v1321 = vadd.f32 %v1225, %v1282
        %v1322 = vadd.f32 %v1226, %v1284
        %v1323 = vadd.f32 %v1227, %v1287
        %v1324 = vadd.f32 %v1228, %v1289
        %v1325 = vadd.f32 %v1229, %v1292
        %v1326 = vadd.f32 %v1230, %v1294
        %v1327 = vrot.slane %v640, 2
        %v1328 = vrot.slane %v646, 2
        %v1329 = vsel %vm1060, %v1327, %v1328
        %v1330 = vrot.slane %v650, 2
        %v1331 = vsel %vm1060, %v1328, %v1330
        %v1332 = vrot.slane %v656, 2
        %v1333 = vrot.slane %v660, 2
        %v1334 = vsel %vm1060, %v1332, %v1333
        %v1335 = vrot.slane %v666, 2
        %v1336 = vsel %vm1060, %v1333, %v1335
        %v1337 = vrot.slane %v670, 2
        %v1338 = vrot.slane %v676, 2
        %v1339 = vsel %vm1060, %v1337, %v1338
        %v1340 = vrot.slane %v680, 2
        %v1341 = vsel %vm1060, %v1338, %v1340
        %v1342 = vrot.slane %v686, 2
        %v1343 = vrot.slane %v690, 2
        %v1344 = vsel %vm1060, %v1342, %v1343
        %v1345 = vrot.slane %v696, 2
        %v1346 = vsel %vm1060, %v1343, %v1345
        %v1347 = vrot.slane %v700, 2
        %v1348 = vrot.slane %v706, 2
        %v1349 = vsel %vm1060, %v1347, %v1348
        %v1350 = vrot.slane %v710, 2
        %v1351 = vsel %vm1060, %v1348, %v1350
        %v1352 = vrot.slane %v716, 2
        %v1353 = vrot.slane %v720, 2
        %v1354 = vsel %vm1060, %v1352, %v1353
        %v1355 = vrot.slane %v726, 2
        %v1356 = vsel %vm1060, %v1353, %v1355
        %v1357 = vrot.slane %v730, 2
        %v1358 = vrot.slane %v736, 2
        %v1359 = vsel %vm1060, %v1357, %v1358
        %v1360 = vrot.slane %v740, 2
        %v1361 = vsel %vm1060, %v1358, %v1360
        %v1362 = vrot.slane %v746, 2
        %v1363 = vrot.slane %v750, 2
        %v1364 = vsel %vm1060, %v1362, %v1363
        %v1365 = vrot.slane %v755, 2
        %v1366 = vsel %vm1060, %v1363, %v1365
        %1367 = vrot.lane.b32.xlu0 %v1329, 96
        %v1368 = vpop.permute.xlu0 %1367
        %1369 = vrot.lane.b32.xlu0 %v1331, 96
        %v1370 = vpop.permute.xlu0 %1369
        %1371 = vrot.lane.b32.xlu0 %v1334, 96
        %v1372 = vpop.permute.xlu0 %1371
        %1373 = vrot.lane.b32.xlu0 %v1336, 96
        %v1374 = vpop.permute.xlu0 %1373
        %1375 = vrot.lane.b32.xlu0 %v1339, 96
        %v1376 = vpop.permute.xlu0 %1375
        %1377 = vrot.lane.b32.xlu0 %v1341, 96
        %v1378 = vpop.permute.xlu0 %1377
        %1379 = vrot.lane.b32.xlu0 %v1344, 96
        %v1380 = vpop.permute.xlu0 %1379
        %1381 = vrot.lane.b32.xlu0 %v1346, 96
        %v1382 = vpop.permute.xlu0 %1381
        %1383 = vrot.lane.b32.xlu0 %v1349, 96
        %v1384 = vpop.permute.xlu0 %1383
        %1385 = vrot.lane.b32.xlu0 %v1351, 96
        %v1386 = vpop.permute.xlu0 %1385
        %1387 = vrot.lane.b32.xlu0 %v1354, 96
        %v1388 = vpop.permute.xlu0 %1387
        %1389 = vrot.lane.b32.xlu0 %v1356, 96
        %v1390 = vpop.permute.xlu0 %1389
        %1391 = vrot.lane.b32.xlu0 %v1359, 96
        %v1392 = vpop.permute.xlu0 %1391
        %1393 = vrot.lane.b32.xlu0 %v1361, 96
        %v1394 = vpop.permute.xlu0 %1393
        %1395 = vrot.lane.b32.xlu0 %v1364, 96
        %v1396 = vpop.permute.xlu0 %1395
        %1397 = vrot.lane.b32.xlu0 %v1366, 96
        %v1398 = vpop.permute.xlu0 %1397
        %v1415 = vadd.f32 %v1311, %v1368
        %v1416 = vadd.f32 %v1312, %v1370
        %v1417 = vadd.f32 %v1313, %v1372
        %v1418 = vadd.f32 %v1314, %v1374
        %v1419 = vadd.f32 %v1315, %v1376
        %v1420 = vadd.f32 %v1316, %v1378
        %v1421 = vadd.f32 %v1317, %v1380
        %v1422 = vadd.f32 %v1318, %v1382
        %v1423 = vadd.f32 %v1319, %v1384
        %v1424 = vadd.f32 %v1320, %v1386
        %v1425 = vadd.f32 %v1321, %v1388
        %v1426 = vadd.f32 %v1322, %v1390
        %v1427 = vadd.f32 %v1323, %v1392
        %v1428 = vadd.f32 %v1324, %v1394
        %v1429 = vadd.f32 %v1325, %v1396
        %v1430 = vadd.f32 %v1326, %v1398
        %1433 = vrot.lane.b32.xlu0 %v656, 64
        %v1434 = vpop.permute.xlu0 %1433
        %1435 = vrot.lane.b32.xlu0 %v660, 64
        %v1436 = vpop.permute.xlu0 %1435
        %1437 = vrot.lane.b32.xlu0 %v670, 64
        %v1438 = vpop.permute.xlu0 %1437
        %1439 = vrot.lane.b32.xlu0 %v676, 64
        %v1440 = vpop.permute.xlu0 %1439
        %1441 = vrot.lane.b32.xlu0 %v686, 64
        %v1442 = vpop.permute.xlu0 %1441
        %1443 = vrot.lane.b32.xlu0 %v690, 64
        %v1444 = vpop.permute.xlu0 %1443
        %1445 = vrot.lane.b32.xlu0 %v700, 64
        %v1446 = vpop.permute.xlu0 %1445
        %1447 = vrot.lane.b32.xlu0 %v706, 64
        %v1448 = vpop.permute.xlu0 %1447
        %1449 = vrot.lane.b32.xlu0 %v716, 64
        %v1450 = vpop.permute.xlu0 %1449
        %1451 = vrot.lane.b32.xlu0 %v720, 64
        %v1452 = vpop.permute.xlu0 %1451
        %1453 = vrot.lane.b32.xlu0 %v730, 64
        %v1454 = vpop.permute.xlu0 %1453
        %1455 = vrot.lane.b32.xlu0 %v736, 64
        %v1456 = vpop.permute.xlu0 %1455
        %1457 = vrot.lane.b32.xlu0 %v746, 64
        %v1458 = vpop.permute.xlu0 %1457
        %1459 = vrot.lane.b32.xlu0 %v750, 64
        %v1460 = vpop.permute.xlu0 %1459
        %1461 = vrot.lane.b32.xlu0 %v758, 64
        %v1462 = vpop.permute.xlu0 %1461
        %1463 = vrot.lane.b32.xlu0 %v763, 64
        %v1464 = vpop.permute.xlu0 %1463
        %v1481 = vadd.f32 %v1415, %v1434
        %v1482 = vadd.f32 %v1416, %v1436
        %v1483 = vadd.f32 %v1417, %v1438
        %v1484 = vadd.f32 %v1418, %v1440
        %v1485 = vadd.f32 %v1419, %v1442
        %v1486 = vadd.f32 %v1420, %v1444
        %v1487 = vadd.f32 %v1421, %v1446
        %v1488 = vadd.f32 %v1422, %v1448
        %v1489 = vadd.f32 %v1423, %v1450
        %v1490 = vadd.f32 %v1424, %v1452
        %v1491 = vadd.f32 %v1425, %v1454
        %v1492 = vadd.f32 %v1426, %v1456
        %v1493 = vadd.f32 %v1427, %v1458
        %v1494 = vadd.f32 %v1428, %v1460
        %v1495 = vadd.f32 %v1429, %v1462
        %v1496 = vadd.f32 %v1430, %v1464
        %v1498 = vrot.slane %v758, 1
        %v1499 = vrot.slane %v763, 1
        %v1500 = vsel %vm955, %v1498, %v1499
        %v1501 = vrot.slane %v766, 1
        %v1502 = vsel %vm955, %v1499, %v1501
        %1503 = vrot.lane.b32.xlu0 %v1262, 32
        %v1504 = vpop.permute.xlu0 %1503
        %1505 = vrot.lane.b32.xlu0 %v1264, 32
        %v1506 = vpop.permute.xlu0 %1505
        %1507 = vrot.lane.b32.xlu0 %v1267, 32
        %v1508 = vpop.permute.xlu0 %1507
        %1509 = vrot.lane.b32.xlu0 %v1269, 32
        %v1510 = vpop.permute.xlu0 %1509
        %1511 = vrot.lane.b32.xlu0 %v1272, 32
        %v1512 = vpop.permute.xlu0 %1511
        %1513 = vrot.lane.b32.xlu0 %v1274, 32
        %v1514 = vpop.permute.xlu0 %1513
        %1515 = vrot.lane.b32.xlu0 %v1277, 32
        %v1516 = vpop.permute.xlu0 %1515
        %1517 = vrot.lane.b32.xlu0 %v1279, 32
        %v1518 = vpop.permute.xlu0 %1517
        %1519 = vrot.lane.b32.xlu0 %v1282, 32
        %v1520 = vpop.permute.xlu0 %1519
        %1521 = vrot.lane.b32.xlu0 %v1284, 32
        %v1522 = vpop.permute.xlu0 %1521
        %1523 = vrot.lane.b32.xlu0 %v1287, 32
        %v1524 = vpop.permute.xlu0 %1523
        %1525 = vrot.lane.b32.xlu0 %v1289, 32
        %v1526 = vpop.permute.xlu0 %1525
        %1527 = vrot.lane.b32.xlu0 %v1292, 32
        %v1528 = vpop.permute.xlu0 %1527
        %1529 = vrot.lane.b32.xlu0 %v1294, 32
        %v1530 = vpop.permute.xlu0 %1529
        %1531 = vrot.lane.b32.xlu0 %v1500, 32
        %v1532 = vpop.permute.xlu0 %1531
        %1533 = vrot.lane.b32.xlu0 %v1502, 32
        %v1534 = vpop.permute.xlu0 %1533
        %v1551 = vadd.f32 %v1481, %v1504
        %v1552 = vadd.f32 %v1482, %v1506
        %v1553 = vadd.f32 %v1483, %v1508
        %v1554 = vadd.f32 %v1484, %v1510
        %v1555 = vadd.f32 %v1485, %v1512
        %v1556 = vadd.f32 %v1486, %v1514
        %v1557 = vadd.f32 %v1487, %v1516
        %v1558 = vadd.f32 %v1488, %v1518
        %v1559 = vadd.f32 %v1489, %v1520
        %v1560 = vadd.f32 %v1490, %v1522
        %v1561 = vadd.f32 %v1491, %v1524
        %v1562 = vadd.f32 %v1492, %v1526
        %v1563 = vadd.f32 %v1493, %v1528
        %v1564 = vadd.f32 %v1494, %v1530
        %v1565 = vadd.f32 %v1495, %v1532
        %v1566 = vadd.f32 %v1496, %v1534
        %v1591 = vrot.slane %v821, 2
        %v1592 = vrot.slane %v824, 2
        %v1593 = vsel %vm1060, %v1591, %v1592
        %v1594 = vrot.slane %v829, 2
        %v1595 = vsel %vm1060, %v1592, %v1594
        %v1596 = vrot.slane %v832, 2
        %v1597 = vrot.slane %v837, 2
        %v1598 = vsel %vm1060, %v1596, %v1597
        %v1599 = vrot.slane %v840, 2
        %v1600 = vsel %vm1060, %v1597, %v1599
        %v1601 = vrot.slane %v845, 2
        %v1602 = vrot.slane %v848, 2
        %v1603 = vsel %vm1060, %v1601, %v1602
        %v1604 = vrot.slane %v853, 2
        %v1605 = vsel %vm1060, %v1602, %v1604
        %v1606 = vrot.slane %v856, 2
        %v1607 = vrot.slane %v861, 2
        %v1608 = vsel %vm1060, %v1606, %v1607
        %v1609 = vrot.slane %v864, 2
        %v1610 = vsel %vm1060, %v1607, %v1609
        %v1611 = vrot.slane %v869, 2
        %v1612 = vrot.slane %v872, 2
        %v1613 = vsel %vm1060, %v1611, %v1612
        %v1614 = vrot.slane %v877, 2
        %v1615 = vsel %vm1060, %v1612, %v1614
        %v1616 = vrot.slane %v880, 2
        %v1617 = vrot.slane %v885, 2
        %v1618 = vsel %vm1060, %v1616, %v1617
        %v1619 = vrot.slane %v888, 2
        %v1620 = vsel %vm1060, %v1617, %v1619
        %v1621 = vrot.slane %v893, 2
        %v1622 = vrot.slane %v896, 2
        %v1623 = vsel %vm1060, %v1621, %v1622
        %v1624 = vrot.slane %v901, 2
        %v1625 = vsel %vm1060, %v1622, %v1624
        %v1626 = vrot.slane %v904, 2
        %v1627 = vrot.slane %v909, 2
        %v1628 = vsel %vm1060, %v1626, %v1627
        %v1629 = vrot.slane %v912, 2
        %v1630 = vsel %vm1060, %v1627, %v1629
        %v1647 = vadd.f32 %v1551, %v1593
        %v1648 = vadd.f32 %v1552, %v1595
        %v1649 = vadd.f32 %v1553, %v1598
        %v1650 = vadd.f32 %v1554, %v1600
        %v1651 = vadd.f32 %v1555, %v1603
        %v1652 = vadd.f32 %v1556, %v1605
        %v1653 = vadd.f32 %v1557, %v1608
        %v1654 = vadd.f32 %v1558, %v1610
        %v1655 = vadd.f32 %v1559, %v1613
        %v1656 = vadd.f32 %v1560, %v1615
        %v1657 = vadd.f32 %v1561, %v1618
        %v1658 = vadd.f32 %v1562, %v1620
        %v1659 = vadd.f32 %v1563, %v1623
        %v1660 = vadd.f32 %v1564, %v1625
        %v1661 = vadd.f32 %v1565, %v1628
        %v1662 = vadd.f32 %v1566, %v1630
        %v1663 = vmax.f32 %v1647, 0.0
        %v1664 = vmax.f32 %v1648, 0.0
        %v1665 = vmax.f32 %v1649, 0.0
        %v1666 = vmax.f32 %v1650, 0.0
        %v1667 = vmax.f32 %v1651, 0.0
        %v1668 = vmax.f32 %v1652, 0.0
        %v1669 = vmax.f32 %v1653, 0.0
        %v1670 = vmax.f32 %v1654, 0.0
        %v1671 = vmax.f32 %v1655, 0.0
        %v1672 = vmax.f32 %v1656, 0.0
        %v1673 = vmax.f32 %v1657, 0.0
        %v1674 = vmax.f32 %v1658, 0.0
        %v1675 = vmax.f32 %v1659, 0.0
        %v1676 = vmax.f32 %v1660, 0.0
        %v1677 = vmax.f32 %v1661, 0.0
        %v1678 = vmax.f32 %v1662, 0.0
        %v1679 = vpack.c.bf16 %v1664, %v1663
        %v1680 = vpack.c.bf16 %v1666, %v1665
        %v1681 = vpack.c.bf16 %v1668, %v1667
        %v1682 = vpack.c.bf16 %v1670, %v1669
        %v1683 = vpack.c.bf16 %v1672, %v1671
        %v1684 = vpack.c.bf16 %v1674, %v1673
        %v1685 = vpack.c.bf16 %v1676, %v1675
        %v1686 = vpack.c.bf16 %v1678, %v1677
        %v1687 = vld [vmem:[%s3] sm:$0xf]
        %v1688 = vld [vmem:[%s3 + $0x4] sm:$0xf]
        %v1689 = vld [vmem:[%s3 + $0x8] sm:$0xf]
        %v1690 = vld [vmem:[%s3 + $0xc] sm:$0xf]
        %v1695 = vunpack.c.l.b16 %v1687
        %v1696 = vunpack.c.l.b16 %v1688
        %v1697 = vunpack.c.l.b16 %v1689
        %v1698 = vunpack.c.l.b16 %v1690
        %v1699 = vpack.c.b16 %v1696, %v1695
        %v1700 = vpack.c.b16 %v1698, %v1697
        %vm1703 = vcmask 261120
        %v1705 = vsel %vm1703, %v1679, 0
        %v1708 = vsel %vm1703, %v1680, 0
        %v1711 = vsel %vm1703, %v1681, 0
        %v1714 = vsel %vm1703, %v1682, 0
        %v1717 = vsel %vm1703, %v1683, 0
        %v1720 = vsel %vm1703, %v1684, 0
        %v1723 = vsel %vm1703, %v1685, 0
        %v1726 = vsel %vm1703, %v1686, 0
        %1728 = vmatprep.subr.bf16.mxu0 0
        %1729 = vmatpush1.bf16.msra.mxu0 %v1699
        %1730 = vmatprep.subr.bf16.mxu0 0
        %1731 = vmatpush1.bf16.msra.mxu0 %v1700
        %1732 = vmatprep.subr.bf16.mxu0 0
        %1733 = vmatpush1.bf16.msra.mxu0 0
        %1734 = vmatprep.subr.bf16.mxu0 0
        %1735 = vmatpush1.bf16.msra.mxu0 0
        %1736 = vmatprep.subr.bf16.mxu0 0
        %1737 = vmatpush1.bf16.msra.mxu0 0
        %1738 = vmatprep.subr.bf16.mxu0 0
        %1739 = vmatpush1.bf16.msra.mxu0 0
        %1740 = vmatprep.subr.bf16.mxu0 0
        %1741 = vmatpush1.bf16.msra.mxu0 0
        %1742 = vmatprep.subr.bf16.mxu0 0
        %1743 = vmatpush1.bf16.msra.mxu0 0
        %1744 = vmatprep.subr.bf16.mxu0 0
        %1745 = vmatpush1.bf16.msra.mxu0 0
        %1746 = vmatprep.subr.bf16.mxu0 0
        %1747 = vmatpush1.bf16.msra.mxu0 0
        %1748 = vmatprep.subr.bf16.mxu0 0
        %1749 = vmatpush1.bf16.msra.mxu0 0
        %1750 = vmatprep.subr.bf16.mxu0 0
        %1751 = vmatpush1.bf16.msra.mxu0 0
        %1752 = vmatprep.subr.bf16.mxu0 0
        %1753 = vmatpush1.bf16.msra.mxu0 0
        %1754 = vmatprep.subr.bf16.mxu0 0
        %1755 = vmatpush1.bf16.msra.mxu0 0
        %1756 = vmatprep.subr.bf16.mxu0 0
        %1757 = vmatpush1.bf16.msra.mxu0 0
        %1758 = vmatprep.subr.bf16.mxu0 0
        %1759 = vmatpush1.bf16.msra.mxu0 0
        %1760 = vmatprep.mubr.bf16.mxu0 0
        %1761 = vmatmul.mubr.bf16.gmra.mrb[0].mxu0 %v1705
        %v1762 = vpop.f32.mrb[0].mxu0
        %v1763 = vadd.f32 0.0, %v1762
        %v1764 = vpop.f32.mrb[0].mxu0
        %v1765 = vpop.f32.mrb[0].mxu0
        %v1766 = vadd.f32 0.0, %v1765
        %v1767 = vpop.f32.mrb[0].mxu0
        %1768 = vmatprep.mubr.bf16.mxu0 0
        %1769 = vmatmul.mubr.bf16.gmra.mrb[0].mxu0 %v1708
        %v1770 = vpop.f32.mrb[0].mxu0
        %v1771 = vadd.f32 0.0, %v1770
        %v1772 = vpop.f32.mrb[0].mxu0
        %v1773 = vpop.f32.mrb[0].mxu0
        %v1774 = vadd.f32 0.0, %v1773
        %v1775 = vpop.f32.mrb[0].mxu0
        %1776 = vmatprep.mubr.bf16.mxu0 0
        %1777 = vmatmul.mubr.bf16.gmra.mrb[0].mxu0 %v1711
        %v1778 = vpop.f32.mrb[0].mxu0
        %v1779 = vadd.f32 0.0, %v1778
        %v1780 = vpop.f32.mrb[0].mxu0
        %v1781 = vpop.f32.mrb[0].mxu0
        %v1782 = vadd.f32 0.0, %v1781
        %v1783 = vpop.f32.mrb[0].mxu0
        %1784 = vmatprep.mubr.bf16.mxu0 0
        %1785 = vmatmul.mubr.bf16.gmra.mrb[0].mxu0 %v1714
        %v1786 = vpop.f32.mrb[0].mxu0
        %v1787 = vadd.f32 0.0, %v1786
        %v1788 = vpop.f32.mrb[0].mxu0
        %v1789 = vpop.f32.mrb[0].mxu0
        %v1790 = vadd.f32 0.0, %v1789
        %v1791 = vpop.f32.mrb[0].mxu0
        %1792 = vmatprep.mubr.bf16.mxu0 0
        %1793 = vmatmul.mubr.bf16.gmra.mrb[0].mxu0 %v1717
        %v1794 = vpop.f32.mrb[0].mxu0
        %v1795 = vadd.f32 0.0, %v1794
        %v1796 = vpop.f32.mrb[0].mxu0
        %v1797 = vpop.f32.mrb[0].mxu0
        %v1798 = vadd.f32 0.0, %v1797
        %v1799 = vpop.f32.mrb[0].mxu0
        %1800 = vmatprep.mubr.bf16.mxu0 0
        %1801 = vmatmul.mubr.bf16.gmra.mrb[0].mxu0 %v1720
        %v1802 = vpop.f32.mrb[0].mxu0
        %v1803 = vadd.f32 0.0, %v1802
        %v1804 = vpop.f32.mrb[0].mxu0
        %v1805 = vpop.f32.mrb[0].mxu0
        %v1806 = vadd.f32 0.0, %v1805
        %v1807 = vpop.f32.mrb[0].mxu0
        %1808 = vmatprep.mubr.bf16.mxu0 0
        %1809 = vmatmul.mubr.bf16.gmra.mrb[0].mxu0 %v1723
        %v1810 = vpop.f32.mrb[0].mxu0
        %v1811 = vadd.f32 0.0, %v1810
        %v1812 = vpop.f32.mrb[0].mxu0
        %v1813 = vpop.f32.mrb[0].mxu0
        %v1814 = vadd.f32 0.0, %v1813
        %v1815 = vpop.f32.mrb[0].mxu0
        %1816 = vmatprep.mubr.bf16.mxu0 0
        %1817 = vmatmul.mubr.bf16.gmra.mrb[0].mxu0 %v1726
        %v1818 = vpop.f32.mrb[0].mxu0
        %v1819 = vadd.f32 0.0, %v1818
        %v1820 = vpop.f32.mrb[0].mxu0
        %v1821 = vpop.f32.mrb[0].mxu0
        %v1822 = vadd.f32 0.0, %v1821
        %v1823 = vpop.f32.mrb[0].mxu0
        %1824 = vdwg.mxu0
        %v1825 = vld [vmem:[%s244] sm:$0xff]
        %v1826 = vld [vmem:[%s244 + $0x8] sm:$0xff]
        %v1827 = vld [vmem:[%s244 + $0x10] sm:$0xff]
        %v1828 = vld [vmem:[%s244 + $0x18] sm:$0xff]
        %v1829 = vld [vmem:[%s244 + $0x20] sm:$0xff]
        %v1830 = vld [vmem:[%s244 + $0x28] sm:$0xff]
        %v1831 = vld [vmem:[%s244 + $0x30] sm:$0xff]
        %v1832 = vld [vmem:[%s244 + $0x38] sm:$0xff]
        %v1833 = vld [vmem:[%s244 + $0x40] sm:$0xff]
        %v1834 = vld [vmem:[%s244 + $0x48] sm:$0xff]
        %v1835 = vld [vmem:[%s244 + $0x50] sm:$0xff]
        %v1836 = vld [vmem:[%s244 + $0x58] sm:$0xff]
        %v1837 = vld [vmem:[%s244 + $0x60] sm:$0xff]
        %v1838 = vld [vmem:[%s244 + $0x68] sm:$0xff]
        %v1839 = vld [vmem:[%s244 + $0x70] sm:$0xff]
        %v1840 = vld [vmem:[%s244 + $0x78] sm:$0xff]
        %v1841 = vadd.f32 %v1825, %v1763
        %v1842 = vadd.f32 %v1826, %v1766
        %v1843 = vadd.f32 %v1827, %v1771
        %v1844 = vadd.f32 %v1828, %v1774
        %v1845 = vadd.f32 %v1829, %v1779
        %v1846 = vadd.f32 %v1830, %v1782
        %v1847 = vadd.f32 %v1831, %v1787
        %v1848 = vadd.f32 %v1832, %v1790
        %v1849 = vadd.f32 %v1833, %v1795
        %v1850 = vadd.f32 %v1834, %v1798
        %v1851 = vadd.f32 %v1835, %v1803
        %v1852 = vadd.f32 %v1836, %v1806
        %v1853 = vadd.f32 %v1837, %v1811
        %v1854 = vadd.f32 %v1838, %v1814
        %v1855 = vadd.f32 %v1839, %v1819
        %v1856 = vadd.f32 %v1840, %v1822
        %1857 = vst [vmem:[%s273] sm:$0xff] %v1841
        %1858 = vst [vmem:[%s273 + $0x8] sm:$0xff] %v1842
        %1859 = vst [vmem:[%s273 + $0x10] sm:$0xff] %v1843
        %1860 = vst [vmem:[%s273 + $0x18] sm:$0xff] %v1844
        %1861 = vst [vmem:[%s273 + $0x20] sm:$0xff] %v1845
        %1862 = vst [vmem:[%s273 + $0x28] sm:$0xff] %v1846
        %1863 = vst [vmem:[%s273 + $0x30] sm:$0xff] %v1847
        %1864 = vst [vmem:[%s273 + $0x38] sm:$0xff] %v1848
        %1865 = vst [vmem:[%s273 + $0x40] sm:$0xff] %v1849
        %1866 = vst [vmem:[%s273 + $0x48] sm:$0xff] %v1850
        %1867 = vst [vmem:[%s273 + $0x50] sm:$0xff] %v1851
        %1868 = vst [vmem:[%s273 + $0x58] sm:$0xff] %v1852
        %1869 = vst [vmem:[%s273 + $0x60] sm:$0xff] %v1853
        %1870 = vst [vmem:[%s273 + $0x68] sm:$0xff] %v1854
        %1871 = vst [vmem:[%s273 + $0x70] sm:$0xff] %v1855
        %1872 = vst [vmem:[%s273 + $0x78] sm:$0xff] %v1856
        %s1873 = sand.u32 %s142, 1
        %s1874 = scalar_lea.sflag [#allocation4], %s1873
        %s1875 = sand.u32 %s142, 1
        %s1876 = smul.addr %s1875, 128
        %s1877 = scalar_lea.vmem [#allocation7], %s1876
        // Predicated region
        $region45: #{tpu_custom_call.1} parent=35 // pred_check
          %p1878 = pneg %p152
        $region46: #{tpu_custom_call.1} parent=35 // pred_check_branch
          %1880 = sbr.rel (%p1878) target = $region48
        $region47: #{tpu_custom_call.1} parent=35 // pred_region
          %s1881 = smul.u32 16, %s29
          %s1883 = ssub.s32 2048, 2048
          %1884 = vsyncadd %s1874, %s1883
          %s1885 = smul.addr %s28, 32
          %s1886 = sadd.s32 %s1881, %s1885
          %s1887 = smul.addr %s1886, 128
          %s1888 = scalar_lea.hbm %s4, %s1887
          %s1889 = sshll.u32 %s1877, 4
          %s1890 = int_to_ptr.vmem [resolvable:$true] %s1889
          %1895 = dma.vmem_to_hbm [thread:$0]  %s1890, 2048, %s1888, %s1874, 128, 128, 8
        $region48: #{tpu_custom_call.1} parent=35 // pred_fallthru
          _
      $region36: #{tpu_custom_call.1} parent=5 // pred_fallthru
        _
      %p1896 = scmp.le.s32.totalorder 2, %s19
      // Predicated region
      $region49: #{tpu_custom_call.1} parent=5 // pred_check
        %p1897 = pneg %p1896
      $region50: #{tpu_custom_call.1} parent=5 // pred_check_branch
        %1899 = sbr.rel (%p1897) target = $region52
      $region51: #{tpu_custom_call.1} parent=5 // pred_region
        %s1900 = ssub.s32 %s19, 2
        // Predicated region
        $region53: #{tpu_custom_call.1} parent=51 // pred_check
          %p1901 = pneg %p158
        $region54: #{tpu_custom_call.1} parent=51 // pred_check_branch
          %1903 = sbr.rel (%p1901) target = $region56
        $region55: #{tpu_custom_call.1} parent=51 // pred_region
          %s1904 = sand.u32 %s143, 1
          %s1905 = scalar_lea.sflag [#allocation4], %s1904
          %s1906 = sand.u32 %s143, 1
          %s1907 = smul.addr %s1906, 128
          %s1908 = scalar_lea.vmem [#allocation7], %s1907
          %1909 = dma.done %s1905, 2048
        $region56: #{tpu_custom_call.1} parent=51 // pred_fallthru
          _
      $region52: #{tpu_custom_call.1} parent=5 // pred_fallthru
        _
    $region6: #{tpu_custom_call.1} parent=1 // loop_footer
      %s23 = sadd.s32 1, %s19
    $region7: #{tpu_custom_call.1} parent=1 // loop_footer_branch
      %18 = sbr.rel target = $region3
    $region8: #{tpu_custom_call.1} parent=1 // loop_exit
      _
    %1910 = vsyncpa [#allocation3], 1
    %s1911 = scalar_lea.sflag [#allocation3], 1
    %1912 = vsyncpa %s1911, 1
    %1913 = vsyncpa [#allocation6], 1
    %s1914 = scalar_lea.sflag [#allocation6], 1
    %1915 = vsyncpa %s1914, 1
    %1916 = vsyncpa [#allocation4], 1
    %s1917 = scalar_lea.sflag [#allocation4], 1
    %1918 = vsyncpa %s1917, 1

</llo_original>
